<compile_context>
chip_gen: v5e
topology: v5e:2x2
jax: 0.10.0
libtpu: 0.0.40
codegen_flags: <defaults>
</compile_context>

<pallas_src>
import math

import jax
import jax.numpy as jnp
from jax import lax
from jax.experimental import pallas as pl
from jax.experimental.pallas import tpu as pltpu

KNN = 8
EPS = 1e-7
T = 0.07
SMOOTH_MOMENTUM = 0.75


# ----------------------------- in-kernel helpers -----------------------------

def _l2norm(y):
    # y / ||y||_2 via rsqrt (EUP slot); clamped to avoid 0-row Inf/NaN.
    s = jnp.sum(y * y, axis=1, keepdims=True)
    return y * lax.rsqrt(jnp.maximum(s, 1e-12))


def _project_l2norm(x, w, b):
    # Embed: linear projection + L2 row-normalization.
    y = jnp.dot(x, w, preferred_element_type=jnp.float32) + b
    return _l2norm(y)


def _nce_mean(emb, pos, wneg_flat):
    """info-NCE CE(label=0), mean over batch.

    emb/pos: (B, C); wneg_flat: (B*K, C), row-major flatten of (B, K, C).
    Negative logits computed as one (B, B*K) MXU matmul + block-diagonal mask
    (no 3-D (K, C) blocks -> no per-slice (8,128) padding waste).
    """
    B = emb.shape[0]
    BK = wneg_flat.shape[0]
    K = BK // B
    inv_t = 1.0 / T
    l_pos = jnp.sum(pos * emb, axis=1, keepdims=True) * inv_t              # (B, 1)
    scores = lax.dot_general(emb, wneg_flat, (((1,), (1,)), ((), ())),
                             preferred_element_type=jnp.float32) * inv_t   # (B, B*K)
    r = lax.broadcasted_iota(jnp.int32, (B, BK), 0)
    c = lax.broadcasted_iota(jnp.int32, (B, BK), 1)
    mask = (c >= r * K) & (c < r * K + K)          # row i keeps its own K negatives
    neg = jnp.where(mask, scores, -jnp.inf)
    m = jnp.maximum(jnp.max(neg, axis=1, keepdims=True), l_pos)
    se = jnp.exp(l_pos - m) + jnp.sum(jnp.exp(neg - m), axis=1, keepdims=True)
    loss_rows = jnp.log(se) + m - l_pos                                     # (B, 1)
    return jnp.sum(loss_rows) * (1.0 / B)


def _tagconv_l2(M, h, w0, w1, b):
    # TAGConv(k=1): [h, M@h] @ W + b, then L2 row-normalization.
    h1 = jnp.dot(M, h, preferred_element_type=jnp.float32)
    y = (jnp.dot(h, w0, preferred_element_type=jnp.float32)
         + jnp.dot(h1, w1, preferred_element_type=jnp.float32)
         + b)
    return _l2norm(y)


def _full_spec(shape):
    return pl.BlockSpec(shape, lambda i, _n=len(shape): (0,) * _n)


# ------------------------- kernel 1: embed + base NCE ------------------------

def _embed_nce_kernel(xs_ref, ws_ref, bs_ref, xt_ref, wt_ref, bt_ref,
                      pos_s_ref, pos_t_ref, wns_ref, wnt_ref,
                      fes_ref, fet_ref, loss_ref):
    f_es = _project_l2norm(xs_ref[...], ws_ref[...], bs_ref[...])
    f_et = _project_l2norm(xt_ref[...], wt_ref[...], bt_ref[...])
    fes_ref[...] = f_es
    fet_ref[...] = f_et
    loss_s = _nce_mean(f_es, pos_s_ref[...], wns_ref[...])
    loss_t = _nce_mean(f_et, pos_t_ref[...], wnt_ref[...])
    loss_ref[...] = jnp.reshape(loss_s + loss_t, (1, 1))


def embed_nce(x_s, w_s, b_s, x_t, w_t, b_t, pos_s, pos_t, wneg_s, wneg_t):
    B, Ds = x_s.shape
    Dt = x_t.shape[1]
    C = w_s.shape[1]
    BK = wneg_s.shape[0]
    f_es, f_et, loss = pl.pallas_call(
        _embed_nce_kernel,
        out_shape=(jax.ShapeDtypeStruct((B, C), jnp.float32),
                   jax.ShapeDtypeStruct((B, C), jnp.float32),
                   jax.ShapeDtypeStruct((1, 1), jnp.float32)),
        grid=(1,),
        in_specs=[_full_spec((B, Ds)), _full_spec((Ds, C)), _full_spec((1, C)),
                  _full_spec((B, Dt)), _full_spec((Dt, C)), _full_spec((1, C)),
                  _full_spec((B, C)), _full_spec((B, C)),
                  _full_spec((BK, C)), _full_spec((BK, C))],
        out_specs=(_full_spec((B, C)), _full_spec((B, C)), _full_spec((1, 1))),
    )(x_s, w_s, b_s.reshape(1, C), x_t, w_t, b_t.reshape(1, C),
      pos_s, pos_t, wneg_s, wneg_t)
    return f_es, f_et, loss[0, 0]


# ----------------- kernel 2: cos-distance, s/t stacked on grid ---------------

def _cosdist_kernel(x_ref, o_ref):
    # cos_distance_softmax: 1 - (soft/||soft||) @ (soft/||soft||)^T
    x = x_ref[...]                                            # (B, NC)
    xm = x - jnp.max(x, axis=1, keepdims=True)
    e = jnp.exp(xm)
    soft = e / jnp.sum(e, axis=1, keepdims=True)
    sq = jnp.sum(soft * soft, axis=1, keepdims=True)          # Gram diagonal
    soft_n = soft * lax.rsqrt(jnp.maximum(sq, EPS))           # softmax rows never hit clamp
    gram = lax.dot_general(soft_n, soft_n, (((1,), (1,)), ((), ())),
                           preferred_element_type=jnp.float32)
    o_ref[...] = 1.0 - gram


def cos_distance_stacked(logits):
    # logits: (2, B, NC) -> (2, B, B); one stream per grid step (parallel -> v7x 2 TCs).
    S, B, NC = logits.shape
    return pl.pallas_call(
        _cosdist_kernel,
        out_shape=jax.ShapeDtypeStruct((S, B, B), jnp.float32),
        grid=(S,),
        in_specs=[pl.BlockSpec((None, B, NC), lambda i: (i, 0, 0))],
        out_specs=pl.BlockSpec((None, B, B), lambda i: (i, 0, 0)),
        compiler_params=pltpu.CompilerParams(dimension_semantics=("parallel",)),
    )(logits)


# -------- kernel 3: TAGConv + L2 + smoothing + graph NCE (both streams) ------

def _graph_nce_kernel(ms_ref, mt_ref, fes_ref, fet_ref,
                      gw0s_ref, gw1s_ref, gbs_ref,
                      gw0t_ref, gw1t_ref, gbt_ref,
                      meml_ref, memab_ref, wns_ref, wnt_ref,
                      loss_ref):
    f_gs = _tagconv_l2(ms_ref[...], fes_ref[...], gw0s_ref[...], gw1s_ref[...], gbs_ref[...])
    f_gt = _tagconv_l2(mt_ref[...], fet_ref[...], gw0t_ref[...], gw1t_ref[...], gbt_ref[...])
    # NCEAverage.get_smooth (momentum = 0.75)
    f_sgs = _l2norm(meml_ref[...] * SMOOTH_MOMENTUM + f_gs * (1.0 - SMOOTH_MOMENTUM))
    f_sgt = _l2norm(memab_ref[...] * SMOOTH_MOMENTUM + f_gt * (1.0 - SMOOTH_MOMENTUM))
    loss_gs = _nce_mean(f_gs, f_sgt, wns_ref[...])
    loss_gt = _nce_mean(f_gt, f_sgs, wnt_ref[...])
    loss_ref[...] = jnp.reshape(loss_gs + loss_gt, (1, 1))


def graph_nce(M_s, M_t, f_es, f_et, gw0_s, gw1_s, gb_s, gw0_t, gw1_t, gb_t,
              mem_l_idx, mem_ab_idx, wneg_s, wneg_t):
    B, C = f_es.shape
    BK = wneg_s.shape[0]
    loss = pl.pallas_call(
        _graph_nce_kernel,
        out_shape=jax.ShapeDtypeStruct((1, 1), jnp.float32),
        grid=(1,),
        in_specs=[_full_spec((B, B)), _full_spec((B, B)),
                  _full_spec((B, C)), _full_spec((B, C)),
                  _full_spec((C, C)), _full_spec((C, C)), _full_spec((1, C)),
                  _full_spec((C, C)), _full_spec((C, C)), _full_spec((1, C)),
                  _full_spec((B, C)), _full_spec((B, C)),
                  _full_spec((BK, C)), _full_spec((BK, C))],
        out_specs=_full_spec((1, 1)),
    )(M_s, M_t, f_es, f_et,
      gw0_s, gw1_s, gb_s.reshape(1, C),
      gw0_t, gw1_t, gb_t.reshape(1, C),
      mem_l_idx, mem_ab_idx, wneg_s, wneg_t)
    return loss[0, 0]


# ----------------------------------- JAX glue ---------------------------------

def _knn_aggregation_matrix(dist, k):
    """Dense equivalent of knn_graph + DGL normalized aggregation for TAGConv.

    Diagonal of dist is forced to -1 so every node's knn set includes itself,
    matching `dist*(1-eye) - eye` + argtopk(smallest k) in the torch code.
    """
    # TODO(synk): DGL symmetric-norm edge-direction convention for DGLGraph(csr)
    # assumed as neighbor -> query with deg^-1/2 applied on both endpoints.
    n = dist.shape[0]
    eye = jnp.eye(n, dtype=dist.dtype)
    d = dist * (1.0 - eye) - eye
    _, knn_idx = lax.top_k(-d, k)                               # k smallest distances
    agg = jax.nn.one_hot(knn_idx, n, dtype=jnp.float32).sum(axis=1)   # (N, N)
    deg = jnp.sum(agg, axis=1)
    nrm = jnp.maximum(deg, 1.0) ** -0.5
    return nrm[:, None] * agg * nrm[None, :]


@jax.jit
def gnn_loss(params, f_s, l_s, f_t, l_t, idx, contrast_idx):
    B = f_s.shape[0]
    mem_l, mem_ab = params["memory_l"], params["memory_ab"]

    # NCEAverage.forward: negatives from the memory banks, flattened to (B*K, C)
    weight_t = mem_l[contrast_idx.reshape(-1)]        # negatives paired with the student stream
    weight_s = mem_ab[contrast_idx.reshape(-1)]       # negatives paired with the teacher stream
    # NCEAverage.get_pos
    pos_s = mem_ab[idx]                               # f_ut
    pos_t = mem_l[idx]                                # f_us

    f_es, f_et, loss = embed_nce(
        f_s.reshape(B, -1), params["w_s"], params["b_s"],
        f_t.reshape(B, -1), params["w_t"], params["b_t"],
        pos_s, pos_t, weight_t, weight_s)

    if B < KNN:
        return loss

    dist = cos_distance_stacked(jnp.stack([l_s, l_t]))             # (2, B, B)
    M = jax.vmap(lambda d: _knn_aggregation_matrix(d, KNN))(dist)  # (2, B, B)

    loss_g = graph_nce(M[0], M[1], f_es, f_et,
                       params["gw0_s"], params["gw1_s"], params["gb_s"],
                       params["gw0_t"], params["gw1_t"], params["gb_t"],
                       mem_l[idx], mem_ab[idx], weight_t, weight_s)

    # TODO(synk): NCEAverage.update() only mutates the registered memory buffers
    # (a side effect) and does not change the returned loss; omitted here.
    return loss + loss_g


# ------------------------------- setup / main ---------------------------------

def init_params(key, s_dim, t_dim, feat_dim, n_data):
    ks = jax.random.split(key, 12)
    stdv = 1.0 / math.sqrt(feat_dim / 3.0)

    def u(k, shape, bound):
        return jax.random.uniform(k, shape, jnp.float32, -bound, bound)

    bs = 1.0 / math.sqrt(s_dim)
    bt = 1.0 / math.sqrt(t_dim)
    bg = 1.0 / math.sqrt(2.0 * feat_dim)   # TAGConv(k=1) linear has fan_in = 2*feat
    return {
        "memory_l": u(ks[0], (n_data, feat_dim), stdv),
        "memory_ab": u(ks[1], (n_data, feat_dim), stdv),
        # Embed_s / Embed_t (stored as (Din, Dout) so the kernel does x @ W)
        "w_s": u(ks[2], (s_dim, feat_dim), bs), "b_s": u(ks[3], (feat_dim,), bs),
        "w_t": u(ks[4], (t_dim, feat_dim), bt), "b_t": u(ks[5], (feat_dim,), bt),
        # TAGConv(k=1) Linear(2*feat, feat) split into W0 (for h) and W1 (for M@h)
        "gw0_s": u(ks[6], (feat_dim, feat_dim), bg), "gw1_s": u(ks[7], (feat_dim, feat_dim), bg),
        "gb_s": u(ks[8], (feat_dim,), bg),
        "gw0_t": u(ks[9], (feat_dim, feat_dim), bg), "gw1_t": u(ks[10], (feat_dim, feat_dim), bg),
        "gb_t": u(ks[11], (feat_dim,), bg),
    }


if __name__ == "__main__":
    # opt: batch_size=16 (>= knn=8 so the GNN branch runs), s_dim=32, t_dim=48,
    #      feat_dim=128 (torch Embed default; lane-dense), n_data=64, nce_k=4, n_cls=10
    B, feat_dim, n_data, K, n_cls = 16, 128, 64, 4, 10
    s_shape = (B, 2, 4, 4)   # NCHW -> s_dim = 32
    t_shape = (B, 3, 4, 4)   # NCHW -> t_dim = 48

    key = jax.random.PRNGKey(0)
    kp, kfs, kft, kls, klt, kidx, kcidx = jax.random.split(key, 7)

    params = init_params(kp, 2 * 4 * 4, 3 * 4 * 4, feat_dim, n_data)
    f_s = jax.random.normal(kfs, s_shape, jnp.float32)
    f_t = jax.random.normal(kft, t_shape, jnp.float32)
    l_s = jax.random.normal(kls, (B, n_cls), jnp.float32)
    l_t = jax.random.normal(klt, (B, n_cls), jnp.float32)
    idx = jax.random.randint(kidx, (B,), 0, n_data)
    contrast_idx = jax.random.randint(kcidx, (B, K), 0, n_data)

    loss = gnn_loss(params, f_s, l_s, f_t, l_t, idx, contrast_idx)
    jax.block_until_ready(loss)
    assert jnp.isfinite(loss)
    print("KERNEL_OK")
</pallas_src>

<mosaic_0001>
module attributes {stable_mosaic.version = 11 : i64} {
  func.func @_cosdist_kernel(%arg0: i32, %arg1: memref<1x16x10xf32, #tpu.memory_space<vmem>>, %arg2: memref<1x16x16xf32, #tpu.memory_space<vmem>>) attributes {dimension_semantics = [#tpu.dimension_semantics<parallel>], iteration_bounds = array<i64: 2>, scalar_prefetch = 0 : i64, scratch_operands = 0 : i64, tpu.core_type = #tpu.core_type<tc>, window_params = [{transform_indices = @transform_0, window_bounds = array<i64: 1, 16, 10>}, {transform_indices = @transform_1, window_bounds = array<i64: 1, 16, 16>}]} {
    %c0 = arith.constant 0 : index
    %c0_0 = arith.constant 0 : index
    %c0_1 = arith.constant 0 : index
    %0 = vector.load %arg1[%c0, %c0_0, %c0_1] : memref<1x16x10xf32, #tpu.memory_space<vmem>>, vector<1x16x10xf32>
    %1 = vector.shape_cast %0 : vector<1x16x10xf32> to vector<16x10xf32>
    %cst = arith.constant dense<0xFF800000> : vector<16xf32>
    %2 = vector.multi_reduction <maximumf>, %1, %cst [1] : vector<16x10xf32> to vector<16xf32>
    %3 = vector.shape_cast %2 : vector<16xf32> to vector<16x1xf32>
    %4 = vector.broadcast %3 : vector<16x1xf32> to vector<16x10xf32>
    %5 = arith.subf %1, %4 : vector<16x10xf32>
    %6 = math.exp %5 : vector<16x10xf32>
    %cst_2 = arith.constant dense<0.000000e+00> : vector<16xf32>
    %7 = vector.multi_reduction <add>, %6, %cst_2 [1] : vector<16x10xf32> to vector<16xf32>
    %8 = vector.shape_cast %7 : vector<16xf32> to vector<16x1xf32>
    %9 = vector.broadcast %8 : vector<16x1xf32> to vector<16x10xf32>
    %10 = arith.divf %6, %9 : vector<16x10xf32>
    %11 = arith.mulf %10, %10 : vector<16x10xf32>
    %cst_3 = arith.constant dense<0.000000e+00> : vector<16xf32>
    %12 = vector.multi_reduction <add>, %11, %cst_3 [1] : vector<16x10xf32> to vector<16xf32>
    %13 = vector.shape_cast %12 : vector<16xf32> to vector<16x1xf32>
    %cst_4 = arith.constant 1.000000e-07 : f32
    %14 = vector.broadcast %cst_4 : f32 to vector<16x1xf32>
    %15 = arith.maximumf %13, %14 : vector<16x1xf32>
    %16 = math.rsqrt %15 : vector<16x1xf32>
    %17 = vector.broadcast %16 : vector<16x1xf32> to vector<16x10xf32>
    %18 = arith.mulf %10, %17 : vector<16x10xf32>
    %cst_5 = arith.constant dense<0.000000e+00> : vector<16x16xf32>
    %19 = tpu.matmul %18, %18, %cst_5 {dimension_numbers = #tpu.dot_dimension_numbers<[1], [1], [0], [0], [0, 0, 1, 0], [], []>} : vector<16x10xf32>, vector<16x10xf32>, vector<16x16xf32> -> vector<16x16xf32>
    %cst_6 = arith.constant 1.000000e+00 : f32
    %20 = vector.broadcast %cst_6 : f32 to vector<16x16xf32>
    %21 = arith.subf %20, %19 : vector<16x16xf32>
    %c0_7 = arith.constant 0 : index
    %c0_8 = arith.constant 0 : index
    %c0_9 = arith.constant 0 : index
    %22 = vector.load %arg2[%c0_7, %c0_8, %c0_9] : memref<1x16x16xf32, #tpu.memory_space<vmem>>, vector<1x16x16xf32>
    %23 = vector.shape_cast %22 : vector<1x16x16xf32> to vector<16x16xf32>
    %24 = vector.shape_cast %21 : vector<16x16xf32> to vector<1x16x16xf32>
    tpu.vector_store %arg2[%c0_7, %c0_8, %c0_9], %24 {strides = array<i32>} : memref<1x16x16xf32, #tpu.memory_space<vmem>>, vector<1x16x16xf32>,
    return
  }
  func.func @transform_0(%arg0: i32) -> (i32, i32, i32) {
    %c0_i32 = arith.constant 0 : i32
    %c0_i32_0 = arith.constant 0 : i32
    %c0_i32_1 = arith.constant 0 : i32
    return %arg0, %c0_i32, %c0_i32_0 : i32, i32, i32
  }
  func.func @transform_1(%arg0: i32) -> (i32, i32, i32) {
    %c0_i32 = arith.constant 0 : i32
    %c0_i32_0 = arith.constant 0 : i32
    %c0_i32_1 = arith.constant 0 : i32
    return %arg0, %c0_i32, %c0_i32_0 : i32, i32, i32
  }
}

module attributes {stable_mosaic.version = 11 : i64} {
  func.func @_embed_nce_kernel(%arg0: i32, %arg1: memref<16x32xf32, #tpu.memory_space<vmem>>, %arg2: memref<32x128xf32, #tpu.memory_space<vmem>>, %arg3: memref<1x128xf32, #tpu.memory_space<vmem>>, %arg4: memref<16x48xf32, #tpu.memory_space<vmem>>, %arg5: memref<48x128xf32, #tpu.memory_space<vmem>>, %arg6: memref<1x128xf32, #tpu.memory_space<vmem>>, %arg7: memref<16x128xf32, #tpu.memory_space<vmem>>, %arg8: memref<16x128xf32, #tpu.memory_space<vmem>>, %arg9: memref<64x128xf32, #tpu.memory_space<vmem>>, %arg10: memref<64x128xf32, #tpu.memory_space<vmem>>, %arg11: memref<16x128xf32, #tpu.memory_space<vmem>>, %arg12: memref<16x128xf32, #tpu.memory_space<vmem>>, %arg13: memref<1x1xf32, #tpu.memory_space<vmem>>) attributes {dimension_semantics = [#tpu.dimension_semantics<arbitrary>], iteration_bounds = array<i64: 1>, scalar_prefetch = 0 : i64, scratch_operands = 0 : i64, tpu.core_type = #tpu.core_type<tc>, window_params = [{pipeline_mode = #tpu.pipeline_mode<synchronous>, transform_indices = @transform_0, window_bounds = array<i64: 16, 32>}, {pipeline_mode = #tpu.pipeline_mode<synchronous>, transform_indices = @transform_1, window_bounds = array<i64: 32, 128>}, {pipeline_mode = #tpu.pipeline_mode<synchronous>, transform_indices = @transform_2, window_bounds = array<i64: 1, 128>}, {pipeline_mode = #tpu.pipeline_mode<synchronous>, transform_indices = @transform_3, window_bounds = array<i64: 16, 48>}, {pipeline_mode = #tpu.pipeline_mode<synchronous>, transform_indices = @transform_4, window_bounds = array<i64: 48, 128>}, {pipeline_mode = #tpu.pipeline_mode<synchronous>, transform_indices = @transform_5, window_bounds = array<i64: 1, 128>}, {pipeline_mode = #tpu.pipeline_mode<synchronous>, transform_indices = @transform_6, window_bounds = array<i64: 16, 128>}, {pipeline_mode = #tpu.pipeline_mode<synchronous>, transform_indices = @transform_7, window_bounds = array<i64: 16, 128>}, {pipeline_mode = #tpu.pipeline_mode<synchronous>, transform_indices = @transform_8, window_bounds = array<i64: 64, 128>}, {pipeline_mode = #tpu.pipeline_mode<synchronous>, transform_indices = @transform_9, window_bounds = array<i64: 64, 128>}, {pipeline_mode = #tpu.pipeline_mode<synchronous>, transform_indices = @transform_10, window_bounds = array<i64: 16, 128>}, {pipeline_mode = #tpu.pipeline_mode<synchronous>, transform_indices = @transform_11, window_bounds = array<i64: 16, 128>}, {pipeline_mode = #tpu.pipeline_mode<synchronous>, transform_indices = @transform_12, window_bounds = array<i64: 1, 1>}]} {
    %c0 = arith.constant 0 : index
    %c0_0 = arith.constant 0 : index
    %0 = vector.load %arg1[%c0, %c0_0] : memref<16x32xf32, #tpu.memory_space<vmem>>, vector<16x32xf32>
    %c0_1 = arith.constant 0 : index
    %c0_2 = arith.constant 0 : index
    %1 = vector.load %arg2[%c0_1, %c0_2] : memref<32x128xf32, #tpu.memory_space<vmem>>, vector<32x128xf32>
    %c0_3 = arith.constant 0 : index
    %c0_4 = arith.constant 0 : index
    %2 = vector.load %arg3[%c0_3, %c0_4] : memref<1x128xf32, #tpu.memory_space<vmem>>, vector<1x128xf32>
    %cst = arith.constant dense<0.000000e+00> : vector<16x128xf32>
    %3 = tpu.matmul %0, %1, %cst {dimension_numbers = #tpu.dot_dimension_numbers<[1], [0], [0], [1], [0, 0, 1, 1], [], []>} : vector<16x32xf32>, vector<32x128xf32>, vector<16x128xf32> -> vector<16x128xf32>
    %4 = vector.broadcast %2 : vector<1x128xf32> to vector<16x128xf32>
    %5 = arith.addf %3, %4 : vector<16x128xf32>
    %6 = arith.mulf %5, %5 : vector<16x128xf32>
    %cst_5 = arith.constant dense<0.000000e+00> : vector<16xf32>
    %7 = vector.multi_reduction <add>, %6, %cst_5 [1] : vector<16x128xf32> to vector<16xf32>
    %8 = vector.shape_cast %7 : vector<16xf32> to vector<16x1xf32>
    %cst_6 = arith.constant 9.99999996E-13 : f32
    %9 = vector.broadcast %cst_6 : f32 to vector<16x1xf32>
    %10 = arith.maximumf %8, %9 : vector<16x1xf32>
    %11 = math.rsqrt %10 : vector<16x1xf32>
    %12 = vector.broadcast %11 : vector<16x1xf32> to vector<16x128xf32>
    %13 = arith.mulf %5, %12 : vector<16x128xf32>
    %c0_7 = arith.constant 0 : index
    %c0_8 = arith.constant 0 : index
    %14 = vector.load %arg4[%c0_7, %c0_8] : memref<16x48xf32, #tpu.memory_space<vmem>>, vector<16x48xf32>
    %c0_9 = arith.constant 0 : index
    %c0_10 = arith.constant 0 : index
    %15 = vector.load %arg5[%c0_9, %c0_10] : memref<48x128xf32, #tpu.memory_space<vmem>>, vector<48x128xf32>
    %c0_11 = arith.constant 0 : index
    %c0_12 = arith.constant 0 : index
    %16 = vector.load %arg6[%c0_11, %c0_12] : memref<1x128xf32, #tpu.memory_space<vmem>>, vector<1x128xf32>
    %cst_13 = arith.constant dense<0.000000e+00> : vector<16x128xf32>
    %17 = tpu.matmul %14, %15, %cst_13 {dimension_numbers = #tpu.dot_dimension_numbers<[1], [0], [0], [1], [0, 0, 1, 1], [], []>} : vector<16x48xf32>, vector<48x128xf32>, vector<16x128xf32> -> vector<16x128xf32>
    %18 = vector.broadcast %16 : vector<1x128xf32> to vector<16x128xf32>
    %19 = arith.addf %17, %18 : vector<16x128xf32>
    %20 = arith.mulf %19, %19 : vector<16x128xf32>
    %cst_14 = arith.constant dense<0.000000e+00> : vector<16xf32>
    %21 = vector.multi_reduction <add>, %20, %cst_14 [1] : vector<16x128xf32> to vector<16xf32>
    %22 = vector.shape_cast %21 : vector<16xf32> to vector<16x1xf32>
    %cst_15 = arith.constant 9.99999996E-13 : f32
    %23 = vector.broadcast %cst_15 : f32 to vector<16x1xf32>
    %24 = arith.maximumf %22, %23 : vector<16x1xf32>
    %25 = math.rsqrt %24 : vector<16x1xf32>
    %26 = vector.broadcast %25 : vector<16x1xf32> to vector<16x128xf32>
    %27 = arith.mulf %19, %26 : vector<16x128xf32>
    %c0_16 = arith.constant 0 : index
    %c0_17 = arith.constant 0 : index
    %28 = vector.load %arg11[%c0_16, %c0_17] : memref<16x128xf32, #tpu.memory_space<vmem>>, vector<16x128xf32>
    tpu.vector_store %arg11[%c0_16, %c0_17], %13 {strides = array<i32>} : memref<16x128xf32, #tpu.memory_space<vmem>>, vector<16x128xf32>,
    %c0_18 = arith.constant 0 : index
    %c0_19 = arith.constant 0 : index
    %29 = vector.load %arg12[%c0_18, %c0_19] : memref<16x128xf32, #tpu.memory_space<vmem>>, vector<16x128xf32>
    tpu.vector_store %arg12[%c0_18, %c0_19], %27 {strides = array<i32>} : memref<16x128xf32, #tpu.memory_space<vmem>>, vector<16x128xf32>,
    %c0_20 = arith.constant 0 : index
    %c0_21 = arith.constant 0 : index
    %30 = vector.load %arg7[%c0_20, %c0_21] : memref<16x128xf32, #tpu.memory_space<vmem>>, vector<16x128xf32>
    %c0_22 = arith.constant 0 : index
    %c0_23 = arith.constant 0 : index
    %31 = vector.load %arg9[%c0_22, %c0_23] : memref<64x128xf32, #tpu.memory_space<vmem>>, vector<64x128xf32>
    %32 = arith.mulf %30, %13 : vector<16x128xf32>
    %cst_24 = arith.constant dense<0.000000e+00> : vector<16xf32>
    %33 = vector.multi_reduction <add>, %32, %cst_24 [1] : vector<16x128xf32> to vector<16xf32>
    %34 = vector.shape_cast %33 : vector<16xf32> to vector<16x1xf32>
    %cst_25 = arith.constant 14.2857141 : f32
    %35 = vector.broadcast %cst_25 : f32 to vector<16x1xf32>
    %36 = arith.mulf %34, %35 : vector<16x1xf32>
    %cst_26 = arith.constant dense<0.000000e+00> : vector<16x64xf32>
    %37 = tpu.matmul %13, %31, %cst_26 {dimension_numbers = #tpu.dot_dimension_numbers<[1], [1], [0], [0], [0, 0, 1, 0], [], []>} : vector<16x128xf32>, vector<64x128xf32>, vector<16x64xf32> -> vector<16x64xf32>
    %cst_27 = arith.constant 14.2857141 : f32
    %38 = vector.broadcast %cst_27 : f32 to vector<16x64xf32>
    %39 = arith.mulf %37, %38 : vector<16x64xf32>
    %40 = tpu.iota {dimensions = array<i32: 0>} : vector<16x64xi32>
    %41 = tpu.iota {dimensions = array<i32: 1>} : vector<16x64xi32>
    %c4_i32 = arith.constant 4 : i32
    %42 = vector.broadcast %c4_i32 : i32 to vector<16x64xi32>
    %43 = arith.muli %40, %42 : vector<16x64xi32>
    %44 = arith.cmpi sge, %41, %43 : vector<16x64xi32>
    %c4_i32_28 = arith.constant 4 : i32
    %45 = vector.broadcast %c4_i32_28 : i32 to vector<16x64xi32>
    %46 = arith.muli %40, %45 : vector<16x64xi32>
    %c4_i32_29 = arith.constant 4 : i32
    %47 = vector.broadcast %c4_i32_29 : i32 to vector<16x64xi32>
    %48 = arith.addi %46, %47 : vector<16x64xi32>
    %49 = arith.cmpi slt, %41, %48 : vector<16x64xi32>
    %50 = arith.andi %44, %49 : vector<16x64xi1>
    %cst_30 = arith.constant 0xFF800000 : f32
    %51 = vector.broadcast %cst_30 : f32 to vector<16x64xf32>
    %52 = arith.select %50, %39, %51 : vector<16x64xi1>, vector<16x64xf32>
    %cst_31 = arith.constant dense<0xFF800000> : vector<16xf32>
    %53 = vector.multi_reduction <maximumf>, %52, %cst_31 [1] : vector<16x64xf32> to vector<16xf32>
    %54 = vector.shape_cast %53 : vector<16xf32> to vector<16x1xf32>
    %55 = arith.maximumf %54, %36 : vector<16x1xf32>
    %56 = arith.subf %36, %55 : vector<16x1xf32>
    %57 = math.exp %56 : vector<16x1xf32>
    %58 = vector.broadcast %55 : vector<16x1xf32> to vector<16x64xf32>
    %59 = arith.subf %52, %58 : vector<16x64xf32>
    %60 = math.exp %59 : vector<16x64xf32>
    %cst_32 = arith.constant dense<0.000000e+00> : vector<16xf32>
    %61 = vector.multi_reduction <add>, %60, %cst_32 [1] : vector<16x64xf32> to vector<16xf32>
    %62 = vector.shape_cast %61 : vector<16xf32> to vector<16x1xf32>
    %63 = arith.addf %57, %62 : vector<16x1xf32>
    %64 = math.log %63 : vector<16x1xf32>
    %65 = arith.addf %64, %55 : vector<16x1xf32>
    %66 = arith.subf %65, %36 : vector<16x1xf32>
    %67 = vector.shape_cast %66 : vector<16x1xf32> to vector<1x16x1xf32>
    %cst_33 = arith.constant dense<0.000000e+00> : vector<1xf32>
    %68 = vector.multi_reduction <add>, %67, %cst_33 [1, 2] : vector<1x16x1xf32> to vector<1xf32>
    %69 = vector.shape_cast %68 : vector<1xf32> to vector<1x1x1xf32>
    %70 = vector.extract %69[0, 0, 0] : f32 from vector<1x1x1xf32>
    %cst_34 = arith.constant 6.250000e-02 : f32
    %71 = arith.mulf %70, %cst_34 : f32
    %c0_35 = arith.constant 0 : index
    %c0_36 = arith.constant 0 : index
    %72 = vector.load %arg8[%c0_35, %c0_36] : memref<16x128xf32, #tpu.memory_space<vmem>>, vector<16x128xf32>
    %c0_37 = arith.constant 0 : index
    %c0_38 = arith.constant 0 : index
    %73 = vector.load %arg10[%c0_37, %c0_38] : memref<64x128xf32, #tpu.memory_space<vmem>>, vector<64x128xf32>
    %74 = arith.mulf %72, %27 : vector<16x128xf32>
    %cst_39 = arith.constant dense<0.000000e+00> : vector<16xf32>
    %75 = vector.multi_reduction <add>, %74, %cst_39 [1] : vector<16x128xf32> to vector<16xf32>
    %76 = vector.shape_cast %75 : vector<16xf32> to vector<16x1xf32>
    %cst_40 = arith.constant 14.2857141 : f32
    %77 = vector.broadcast %cst_40 : f32 to vector<16x1xf32>
    %78 = arith.mulf %76, %77 : vector<16x1xf32>
    %cst_41 = arith.constant dense<0.000000e+00> : vector<16x64xf32>
    %79 = tpu.matmul %27, %73, %cst_41 {dimension_numbers = #tpu.dot_dimension_numbers<[1], [1], [0], [0], [0, 0, 1, 0], [], []>} : vector<16x128xf32>, vector<64x128xf32>, vector<16x64xf32> -> vector<16x64xf32>
    %cst_42 = arith.constant 14.2857141 : f32
    %80 = vector.broadcast %cst_42 : f32 to vector<16x64xf32>
    %81 = arith.mulf %79, %80 : vector<16x64xf32>
    %82 = tpu.iota {dimensions = array<i32: 0>} : vector<16x64xi32>
    %83 = tpu.iota {dimensions = array<i32: 1>} : vector<16x64xi32>
    %c4_i32_43 = arith.constant 4 : i32
    %84 = vector.broadcast %c4_i32_43 : i32 to vector<16x64xi32>
    %85 = arith.muli %82, %84 : vector<16x64xi32>
    %86 = arith.cmpi sge, %83, %85 : vector<16x64xi32>
    %c4_i32_44 = arith.constant 4 : i32
    %87 = vector.broadcast %c4_i32_44 : i32 to vector<16x64xi32>
    %88 = arith.muli %82, %87 : vector<16x64xi32>
    %c4_i32_45 = arith.constant 4 : i32
    %89 = vector.broadcast %c4_i32_45 : i32 to vector<16x64xi32>
    %90 = arith.addi %88, %89 : vector<16x64xi32>
    %91 = arith.cmpi slt, %83, %90 : vector<16x64xi32>
    %92 = arith.andi %86, %91 : vector<16x64xi1>
    %cst_46 = arith.constant 0xFF800000 : f32
    %93 = vector.broadcast %cst_46 : f32 to vector<16x64xf32>
    %94 = arith.select %92, %81, %93 : vector<16x64xi1>, vector<16x64xf32>
    %cst_47 = arith.constant dense<0xFF800000> : vector<16xf32>
    %95 = vector.multi_reduction <maximumf>, %94, %cst_47 [1] : vector<16x64xf32> to vector<16xf32>
    %96 = vector.shape_cast %95 : vector<16xf32> to vector<16x1xf32>
    %97 = arith.maximumf %96, %78 : vector<16x1xf32>
    %98 = arith.subf %78, %97 : vector<16x1xf32>
    %99 = math.exp %98 : vector<16x1xf32>
    %100 = vector.broadcast %97 : vector<16x1xf32> to vector<16x64xf32>
    %101 = arith.subf %94, %100 : vector<16x64xf32>
    %102 = math.exp %101 : vector<16x64xf32>
    %cst_48 = arith.constant dense<0.000000e+00> : vector<16xf32>
    %103 = vector.multi_reduction <add>, %102, %cst_48 [1] : vector<16x64xf32> to vector<16xf32>
    %104 = vector.shape_cast %103 : vector<16xf32> to vector<16x1xf32>
    %105 = arith.addf %99, %104 : vector<16x1xf32>
    %106 = math.log %105 : vector<16x1xf32>
    %107 = arith.addf %106, %97 : vector<16x1xf32>
    %108 = arith.subf %107, %78 : vector<16x1xf32>
    %109 = vector.shape_cast %108 : vector<16x1xf32> to vector<1x16x1xf32>
    %cst_49 = arith.constant dense<0.000000e+00> : vector<1xf32>
    %110 = vector.multi_reduction <add>, %109, %cst_49 [1, 2] : vector<1x16x1xf32> to vector<1xf32>
    %111 = vector.shape_cast %110 : vector<1xf32> to vector<1x1x1xf32>
    %112 = vector.extract %111[0, 0, 0] : f32 from vector<1x1x1xf32>
    %cst_50 = arith.constant 6.250000e-02 : f32
    %113 = arith.mulf %112, %cst_50 : f32
    %114 = arith.addf %71, %113 : f32
    %115 = vector.broadcast %114 : f32 to vector<1x1xf32>
    %c0_51 = arith.constant 0 : index
    %c0_52 = arith.constant 0 : index
    %116 = vector.load %arg13[%c0_51, %c0_52] : memref<1x1xf32, #tpu.memory_space<vmem>>, vector<1x1xf32>
    tpu.vector_store %arg13[%c0_51, %c0_52], %115 {strides = array<i32>} : memref<1x1xf32, #tpu.memory_space<vmem>>, vector<1x1xf32>,
    return
  }
  func.func @transform_0(%arg0: i32) -> (i32, i32) {
    %c0_i32 = arith.constant 0 : i32
    %c0_i32_0 = arith.constant 0 : i32
    %c0_i32_1 = arith.constant 0 : i32
    return %c0_i32, %c0_i32_0 : i32, i32
  }
  func.func @transform_1(%arg0: i32) -> (i32, i32) {
    %c0_i32 = arith.constant 0 : i32
    %c0_i32_0 = arith.constant 0 : i32
    %c0_i32_1 = arith.constant 0 : i32
    return %c0_i32, %c0_i32_0 : i32, i32
  }
  func.func @transform_2(%arg0: i32) -> (i32, i32) {
    %c0_i32 = arith.constant 0 : i32
    %c0_i32_0 = arith.constant 0 : i32
    %c0_i32_1 = arith.constant 0 : i32
    return %c0_i32, %c0_i32_0 : i32, i32
  }
  func.func @transform_3(%arg0: i32) -> (i32, i32) {
    %c0_i32 = arith.constant 0 : i32
    %c0_i32_0 = arith.constant 0 : i32
    %c0_i32_1 = arith.constant 0 : i32
    return %c0_i32, %c0_i32_0 : i32, i32
  }
  func.func @transform_4(%arg0: i32) -> (i32, i32) {
    %c0_i32 = arith.constant 0 : i32
    %c0_i32_0 = arith.constant 0 : i32
    %c0_i32_1 = arith.constant 0 : i32
    return %c0_i32, %c0_i32_0 : i32, i32
  }
  func.func @transform_5(%arg0: i32) -> (i32, i32) {
    %c0_i32 = arith.constant 0 : i32
    %c0_i32_0 = arith.constant 0 : i32
    %c0_i32_1 = arith.constant 0 : i32
    return %c0_i32, %c0_i32_0 : i32, i32
  }
  func.func @transform_6(%arg0: i32) -> (i32, i32) {
    %c0_i32 = arith.constant 0 : i32
    %c0_i32_0 = arith.constant 0 : i32
    %c0_i32_1 = arith.constant 0 : i32
    return %c0_i32, %c0_i32_0 : i32, i32
  }
  func.func @transform_7(%arg0: i32) -> (i32, i32) {
    %c0_i32 = arith.constant 0 : i32
    %c0_i32_0 = arith.constant 0 : i32
    %c0_i32_1 = arith.constant 0 : i32
    return %c0_i32, %c0_i32_0 : i32, i32
  }
  func.func @transform_8(%arg0: i32) -> (i32, i32) {
    %c0_i32 = arith.constant 0 : i32
    %c0_i32_0 = arith.constant 0 : i32
    %c0_i32_1 = arith.constant 0 : i32
    return %c0_i32, %c0_i32_0 : i32, i32
  }
  func.func @transform_9(%arg0: i32) -> (i32, i32) {
    %c0_i32 = arith.constant 0 : i32
    %c0_i32_0 = arith.constant 0 : i32
    %c0_i32_1 = arith.constant 0 : i32
    return %c0_i32, %c0_i32_0 : i32, i32
  }
  func.func @transform_10(%arg0: i32) -> (i32, i32) {
    %c0_i32 = arith.constant 0 : i32
    %c0_i32_0 = arith.constant 0 : i32
    %c0_i32_1 = arith.constant 0 : i32
    return %c0_i32, %c0_i32_0 : i32, i32
  }
  func.func @transform_11(%arg0: i32) -> (i32, i32) {
    %c0_i32 = arith.constant 0 : i32
    %c0_i32_0 = arith.constant 0 : i32
    %c0_i32_1 = arith.constant 0 : i32
    return %c0_i32, %c0_i32_0 : i32, i32
  }
  func.func @transform_12(%arg0: i32) -> (i32, i32) {
    %c0_i32 = arith.constant 0 : i32
    %c0_i32_0 = arith.constant 0 : i32
    %c0_i32_1 = arith.constant 0 : i32
    return %c0_i32, %c0_i32_0 : i32, i32
  }
}

module attributes {stable_mosaic.version = 11 : i64} {
  func.func @_graph_nce_kernel(%arg0: i32, %arg1: memref<16x16xf32, #tpu.memory_space<vmem>>, %arg2: memref<16x16xf32, #tpu.memory_space<vmem>>, %arg3: memref<16x128xf32, #tpu.memory_space<vmem>>, %arg4: memref<16x128xf32, #tpu.memory_space<vmem>>, %arg5: memref<128x128xf32, #tpu.memory_space<vmem>>, %arg6: memref<128x128xf32, #tpu.memory_space<vmem>>, %arg7: memref<1x128xf32, #tpu.memory_space<vmem>>, %arg8: memref<128x128xf32, #tpu.memory_space<vmem>>, %arg9: memref<128x128xf32, #tpu.memory_space<vmem>>, %arg10: memref<1x128xf32, #tpu.memory_space<vmem>>, %arg11: memref<16x128xf32, #tpu.memory_space<vmem>>, %arg12: memref<16x128xf32, #tpu.memory_space<vmem>>, %arg13: memref<64x128xf32, #tpu.memory_space<vmem>>, %arg14: memref<64x128xf32, #tpu.memory_space<vmem>>, %arg15: memref<1x1xf32, #tpu.memory_space<vmem>>) attributes {dimension_semantics = [#tpu.dimension_semantics<arbitrary>], iteration_bounds = array<i64: 1>, scalar_prefetch = 0 : i64, scratch_operands = 0 : i64, tpu.core_type = #tpu.core_type<tc>, window_params = [{pipeline_mode = #tpu.pipeline_mode<synchronous>, transform_indices = @transform_0, window_bounds = array<i64: 16, 16>}, {pipeline_mode = #tpu.pipeline_mode<synchronous>, transform_indices = @transform_1, window_bounds = array<i64: 16, 16>}, {pipeline_mode = #tpu.pipeline_mode<synchronous>, transform_indices = @transform_2, window_bounds = array<i64: 16, 128>}, {pipeline_mode = #tpu.pipeline_mode<synchronous>, transform_indices = @transform_3, window_bounds = array<i64: 16, 128>}, {pipeline_mode = #tpu.pipeline_mode<synchronous>, transform_indices = @transform_4, window_bounds = array<i64: 128, 128>}, {pipeline_mode = #tpu.pipeline_mode<synchronous>, transform_indices = @transform_5, window_bounds = array<i64: 128, 128>}, {pipeline_mode = #tpu.pipeline_mode<synchronous>, transform_indices = @transform_6, window_bounds = array<i64: 1, 128>}, {pipeline_mode = #tpu.pipeline_mode<synchronous>, transform_indices = @transform_7, window_bounds = array<i64: 128, 128>}, {pipeline_mode = #tpu.pipeline_mode<synchronous>, transform_indices = @transform_8, window_bounds = array<i64: 128, 128>}, {pipeline_mode = #tpu.pipeline_mode<synchronous>, transform_indices = @transform_9, window_bounds = array<i64: 1, 128>}, {pipeline_mode = #tpu.pipeline_mode<synchronous>, transform_indices = @transform_10, window_bounds = array<i64: 16, 128>}, {pipeline_mode = #tpu.pipeline_mode<synchronous>, transform_indices = @transform_11, window_bounds = array<i64: 16, 128>}, {pipeline_mode = #tpu.pipeline_mode<synchronous>, transform_indices = @transform_12, window_bounds = array<i64: 64, 128>}, {pipeline_mode = #tpu.pipeline_mode<synchronous>, transform_indices = @transform_13, window_bounds = array<i64: 64, 128>}, {pipeline_mode = #tpu.pipeline_mode<synchronous>, transform_indices = @transform_14, window_bounds = array<i64: 1, 1>}]} {
    %c0 = arith.constant 0 : index
    %c0_0 = arith.constant 0 : index
    %0 = vector.load %arg1[%c0, %c0_0] : memref<16x16xf32, #tpu.memory_space<vmem>>, vector<16x16xf32>
    %c0_1 = arith.constant 0 : index
    %c0_2 = arith.constant 0 : index
    %1 = vector.load %arg3[%c0_1, %c0_2] : memref<16x128xf32, #tpu.memory_space<vmem>>, vector<16x128xf32>
    %c0_3 = arith.constant 0 : index
    %c0_4 = arith.constant 0 : index
    %2 = vector.load %arg5[%c0_3, %c0_4] : memref<128x128xf32, #tpu.memory_space<vmem>>, vector<128x128xf32>
    %c0_5 = arith.constant 0 : index
    %c0_6 = arith.constant 0 : index
    %3 = vector.load %arg6[%c0_5, %c0_6] : memref<128x128xf32, #tpu.memory_space<vmem>>, vector<128x128xf32>
    %c0_7 = arith.constant 0 : index
    %c0_8 = arith.constant 0 : index
    %4 = vector.load %arg7[%c0_7, %c0_8] : memref<1x128xf32, #tpu.memory_space<vmem>>, vector<1x128xf32>
    %cst = arith.constant dense<0.000000e+00> : vector<16x128xf32>
    %5 = tpu.matmul %0, %1, %cst {dimension_numbers = #tpu.dot_dimension_numbers<[1], [0], [0], [1], [0, 0, 1, 1], [], []>} : vector<16x16xf32>, vector<16x128xf32>, vector<16x128xf32> -> vector<16x128xf32>
    %cst_9 = arith.constant dense<0.000000e+00> : vector<16x128xf32>
    %6 = tpu.matmul %1, %2, %cst_9 {dimension_numbers = #tpu.dot_dimension_numbers<[1], [0], [0], [1], [0, 0, 1, 1], [], []>} : vector<16x128xf32>, vector<128x128xf32>, vector<16x128xf32> -> vector<16x128xf32>
    %cst_10 = arith.constant dense<0.000000e+00> : vector<16x128xf32>
    %7 = tpu.matmul %5, %3, %cst_10 {dimension_numbers = #tpu.dot_dimension_numbers<[1], [0], [0], [1], [0, 0, 1, 1], [], []>} : vector<16x128xf32>, vector<128x128xf32>, vector<16x128xf32> -> vector<16x128xf32>
    %8 = arith.addf %6, %7 : vector<16x128xf32>
    %9 = vector.broadcast %4 : vector<1x128xf32> to vector<16x128xf32>
    %10 = arith.addf %8, %9 : vector<16x128xf32>
    %11 = arith.mulf %10, %10 : vector<16x128xf32>
    %cst_11 = arith.constant dense<0.000000e+00> : vector<16xf32>
    %12 = vector.multi_reduction <add>, %11, %cst_11 [1] : vector<16x128xf32> to vector<16xf32>
    %13 = vector.shape_cast %12 : vector<16xf32> to vector<16x1xf32>
    %cst_12 = arith.constant 9.99999996E-13 : f32
    %14 = vector.broadcast %cst_12 : f32 to vector<16x1xf32>
    %15 = arith.maximumf %13, %14 : vector<16x1xf32>
    %16 = math.rsqrt %15 : vector<16x1xf32>
    %17 = vector.broadcast %16 : vector<16x1xf32> to vector<16x128xf32>
    %18 = arith.mulf %10, %17 : vector<16x128xf32>
    %c0_13 = arith.constant 0 : index
    %c0_14 = arith.constant 0 : index
    %19 = vector.load %arg2[%c0_13, %c0_14] : memref<16x16xf32, #tpu.memory_space<vmem>>, vector<16x16xf32>
    %c0_15 = arith.constant 0 : index
    %c0_16 = arith.constant 0 : index
    %20 = vector.load %arg4[%c0_15, %c0_16] : memref<16x128xf32, #tpu.memory_space<vmem>>, vector<16x128xf32>
    %c0_17 = arith.constant 0 : index
    %c0_18 = arith.constant 0 : index
    %21 = vector.load %arg8[%c0_17, %c0_18] : memref<128x128xf32, #tpu.memory_space<vmem>>, vector<128x128xf32>
    %c0_19 = arith.constant 0 : index
    %c0_20 = arith.constant 0 : index
    %22 = vector.load %arg9[%c0_19, %c0_20] : memref<128x128xf32, #tpu.memory_space<vmem>>, vector<128x128xf32>
    %c0_21 = arith.constant 0 : index
    %c0_22 = arith.constant 0 : index
    %23 = vector.load %arg10[%c0_21, %c0_22] : memref<1x128xf32, #tpu.memory_space<vmem>>, vector<1x128xf32>
    %cst_23 = arith.constant dense<0.000000e+00> : vector<16x128xf32>
    %24 = tpu.matmul %19, %20, %cst_23 {dimension_numbers = #tpu.dot_dimension_numbers<[1], [0], [0], [1], [0, 0, 1, 1], [], []>} : vector<16x16xf32>, vector<16x128xf32>, vector<16x128xf32> -> vector<16x128xf32>
    %cst_24 = arith.constant dense<0.000000e+00> : vector<16x128xf32>
    %25 = tpu.matmul %20, %21, %cst_24 {dimension_numbers = #tpu.dot_dimension_numbers<[1], [0], [0], [1], [0, 0, 1, 1], [], []>} : vector<16x128xf32>, vector<128x128xf32>, vector<16x128xf32> -> vector<16x128xf32>
    %cst_25 = arith.constant dense<0.000000e+00> : vector<16x128xf32>
    %26 = tpu.matmul %24, %22, %cst_25 {dimension_numbers = #tpu.dot_dimension_numbers<[1], [0], [0], [1], [0, 0, 1, 1], [], []>} : vector<16x128xf32>, vector<128x128xf32>, vector<16x128xf32> -> vector<16x128xf32>
    %27 = arith.addf %25, %26 : vector<16x128xf32>
    %28 = vector.broadcast %23 : vector<1x128xf32> to vector<16x128xf32>
    %29 = arith.addf %27, %28 : vector<16x128xf32>
    %30 = arith.mulf %29, %29 : vector<16x128xf32>
    %cst_26 = arith.constant dense<0.000000e+00> : vector<16xf32>
    %31 = vector.multi_reduction <add>, %30, %cst_26 [1] : vector<16x128xf32> to vector<16xf32>
    %32 = vector.shape_cast %31 : vector<16xf32> to vector<16x1xf32>
    %cst_27 = arith.constant 9.99999996E-13 : f32
    %33 = vector.broadcast %cst_27 : f32 to vector<16x1xf32>
    %34 = arith.maximumf %32, %33 : vector<16x1xf32>
    %35 = math.rsqrt %34 : vector<16x1xf32>
    %36 = vector.broadcast %35 : vector<16x1xf32> to vector<16x128xf32>
    %37 = arith.mulf %29, %36 : vector<16x128xf32>
    %c0_28 = arith.constant 0 : index
    %c0_29 = arith.constant 0 : index
    %38 = vector.load %arg11[%c0_28, %c0_29] : memref<16x128xf32, #tpu.memory_space<vmem>>, vector<16x128xf32>
    %cst_30 = arith.constant 7.500000e-01 : f32
    %39 = vector.broadcast %cst_30 : f32 to vector<16x128xf32>
    %40 = arith.mulf %38, %39 : vector<16x128xf32>
    %cst_31 = arith.constant 2.500000e-01 : f32
    %41 = vector.broadcast %cst_31 : f32 to vector<16x128xf32>
    %42 = arith.mulf %18, %41 : vector<16x128xf32>
    %43 = arith.addf %40, %42 : vector<16x128xf32>
    %44 = arith.mulf %43, %43 : vector<16x128xf32>
    %cst_32 = arith.constant dense<0.000000e+00> : vector<16xf32>
    %45 = vector.multi_reduction <add>, %44, %cst_32 [1] : vector<16x128xf32> to vector<16xf32>
    %46 = vector.shape_cast %45 : vector<16xf32> to vector<16x1xf32>
    %cst_33 = arith.constant 9.99999996E-13 : f32
    %47 = vector.broadcast %cst_33 : f32 to vector<16x1xf32>
    %48 = arith.maximumf %46, %47 : vector<16x1xf32>
    %49 = math.rsqrt %48 : vector<16x1xf32>
    %50 = vector.broadcast %49 : vector<16x1xf32> to vector<16x128xf32>
    %51 = arith.mulf %43, %50 : vector<16x128xf32>
    %c0_34 = arith.constant 0 : index
    %c0_35 = arith.constant 0 : index
    %52 = vector.load %arg12[%c0_34, %c0_35] : memref<16x128xf32, #tpu.memory_space<vmem>>, vector<16x128xf32>
    %cst_36 = arith.constant 7.500000e-01 : f32
    %53 = vector.broadcast %cst_36 : f32 to vector<16x128xf32>
    %54 = arith.mulf %52, %53 : vector<16x128xf32>
    %cst_37 = arith.constant 2.500000e-01 : f32
    %55 = vector.broadcast %cst_37 : f32 to vector<16x128xf32>
    %56 = arith.mulf %37, %55 : vector<16x128xf32>
    %57 = arith.addf %54, %56 : vector<16x128xf32>
    %58 = arith.mulf %57, %57 : vector<16x128xf32>
    %cst_38 = arith.constant dense<0.000000e+00> : vector<16xf32>
    %59 = vector.multi_reduction <add>, %58, %cst_38 [1] : vector<16x128xf32> to vector<16xf32>
    %60 = vector.shape_cast %59 : vector<16xf32> to vector<16x1xf32>
    %cst_39 = arith.constant 9.99999996E-13 : f32
    %61 = vector.broadcast %cst_39 : f32 to vector<16x1xf32>
    %62 = arith.maximumf %60, %61 : vector<16x1xf32>
    %63 = math.rsqrt %62 : vector<16x1xf32>
    %64 = vector.broadcast %63 : vector<16x1xf32> to vector<16x128xf32>
    %65 = arith.mulf %57, %64 : vector<16x128xf32>
    %c0_40 = arith.constant 0 : index
    %c0_41 = arith.constant 0 : index
    %66 = vector.load %arg13[%c0_40, %c0_41] : memref<64x128xf32, #tpu.memory_space<vmem>>, vector<64x128xf32>
    %67 = arith.mulf %65, %18 : vector<16x128xf32>
    %cst_42 = arith.constant dense<0.000000e+00> : vector<16xf32>
    %68 = vector.multi_reduction <add>, %67, %cst_42 [1] : vector<16x128xf32> to vector<16xf32>
    %69 = vector.shape_cast %68 : vector<16xf32> to vector<16x1xf32>
    %cst_43 = arith.constant 14.2857141 : f32
    %70 = vector.broadcast %cst_43 : f32 to vector<16x1xf32>
    %71 = arith.mulf %69, %70 : vector<16x1xf32>
    %cst_44 = arith.constant dense<0.000000e+00> : vector<16x64xf32>
    %72 = tpu.matmul %18, %66, %cst_44 {dimension_numbers = #tpu.dot_dimension_numbers<[1], [1], [0], [0], [0, 0, 1, 0], [], []>} : vector<16x128xf32>, vector<64x128xf32>, vector<16x64xf32> -> vector<16x64xf32>
    %cst_45 = arith.constant 14.2857141 : f32
    %73 = vector.broadcast %cst_45 : f32 to vector<16x64xf32>
    %74 = arith.mulf %72, %73 : vector<16x64xf32>
    %75 = tpu.iota {dimensions = array<i32: 0>} : vector<16x64xi32>
    %76 = tpu.iota {dimensions = array<i32: 1>} : vector<16x64xi32>
    %c4_i32 = arith.constant 4 : i32
    %77 = vector.broadcast %c4_i32 : i32 to vector<16x64xi32>
    %78 = arith.muli %75, %77 : vector<16x64xi32>
    %79 = arith.cmpi sge, %76, %78 : vector<16x64xi32>
    %c4_i32_46 = arith.constant 4 : i32
    %80 = vector.broadcast %c4_i32_46 : i32 to vector<16x64xi32>
    %81 = arith.muli %75, %80 : vector<16x64xi32>
    %c4_i32_47 = arith.constant 4 : i32
    %82 = vector.broadcast %c4_i32_47 : i32 to vector<16x64xi32>
    %83 = arith.addi %81, %82 : vector<16x64xi32>
    %84 = arith.cmpi slt, %76, %83 : vector<16x64xi32>
    %85 = arith.andi %79, %84 : vector<16x64xi1>
    %cst_48 = arith.constant 0xFF800000 : f32
    %86 = vector.broadcast %cst_48 : f32 to vector<16x64xf32>
    %87 = arith.select %85, %74, %86 : vector<16x64xi1>, vector<16x64xf32>
    %cst_49 = arith.constant dense<0xFF800000> : vector<16xf32>
    %88 = vector.multi_reduction <maximumf>, %87, %cst_49 [1] : vector<16x64xf32> to vector<16xf32>
    %89 = vector.shape_cast %88 : vector<16xf32> to vector<16x1xf32>
    %90 = arith.maximumf %89, %71 : vector<16x1xf32>
    %91 = arith.subf %71, %90 : vector<16x1xf32>
    %92 = math.exp %91 : vector<16x1xf32>
    %93 = vector.broadcast %90 : vector<16x1xf32> to vector<16x64xf32>
    %94 = arith.subf %87, %93 : vector<16x64xf32>
    %95 = math.exp %94 : vector<16x64xf32>
    %cst_50 = arith.constant dense<0.000000e+00> : vector<16xf32>
    %96 = vector.multi_reduction <add>, %95, %cst_50 [1] : vector<16x64xf32> to vector<16xf32>
    %97 = vector.shape_cast %96 : vector<16xf32> to vector<16x1xf32>
    %98 = arith.addf %92, %97 : vector<16x1xf32>
    %99 = math.log %98 : vector<16x1xf32>
    %100 = arith.addf %99, %90 : vector<16x1xf32>
    %101 = arith.subf %100, %71 : vector<16x1xf32>
    %102 = vector.shape_cast %101 : vector<16x1xf32> to vector<1x16x1xf32>
    %cst_51 = arith.constant dense<0.000000e+00> : vector<1xf32>
    %103 = vector.multi_reduction <add>, %102, %cst_51 [1, 2] : vector<1x16x1xf32> to vector<1xf32>
    %104 = vector.shape_cast %103 : vector<1xf32> to vector<1x1x1xf32>
    %105 = vector.extract %104[0, 0, 0] : f32 from vector<1x1x1xf32>
    %cst_52 = arith.constant 6.250000e-02 : f32
    %106 = arith.mulf %105, %cst_52 : f32
    %c0_53 = arith.constant 0 : index
    %c0_54 = arith.constant 0 : index
    %107 = vector.load %arg14[%c0_53, %c0_54] : memref<64x128xf32, #tpu.memory_space<vmem>>, vector<64x128xf32>
    %108 = arith.mulf %51, %37 : vector<16x128xf32>
    %cst_55 = arith.constant dense<0.000000e+00> : vector<16xf32>
    %109 = vector.multi_reduction <add>, %108, %cst_55 [1] : vector<16x128xf32> to vector<16xf32>
    %110 = vector.shape_cast %109 : vector<16xf32> to vector<16x1xf32>
    %cst_56 = arith.constant 14.2857141 : f32
    %111 = vector.broadcast %cst_56 : f32 to vector<16x1xf32>
    %112 = arith.mulf %110, %111 : vector<16x1xf32>
    %cst_57 = arith.constant dense<0.000000e+00> : vector<16x64xf32>
    %113 = tpu.matmul %37, %107, %cst_57 {dimension_numbers = #tpu.dot_dimension_numbers<[1], [1], [0], [0], [0, 0, 1, 0], [], []>} : vector<16x128xf32>, vector<64x128xf32>, vector<16x64xf32> -> vector<16x64xf32>
    %cst_58 = arith.constant 14.2857141 : f32
    %114 = vector.broadcast %cst_58 : f32 to vector<16x64xf32>
    %115 = arith.mulf %113, %114 : vector<16x64xf32>
    %116 = tpu.iota {dimensions = array<i32: 0>} : vector<16x64xi32>
    %117 = tpu.iota {dimensions = array<i32: 1>} : vector<16x64xi32>
    %c4_i32_59 = arith.constant 4 : i32
    %118 = vector.broadcast %c4_i32_59 : i32 to vector<16x64xi32>
    %119 = arith.muli %116, %118 : vector<16x64xi32>
    %120 = arith.cmpi sge, %117, %119 : vector<16x64xi32>
    %c4_i32_60 = arith.constant 4 : i32
    %121 = vector.broadcast %c4_i32_60 : i32 to vector<16x64xi32>
    %122 = arith.muli %116, %121 : vector<16x64xi32>
    %c4_i32_61 = arith.constant 4 : i32
    %123 = vector.broadcast %c4_i32_61 : i32 to vector<16x64xi32>
    %124 = arith.addi %122, %123 : vector<16x64xi32>
    %125 = arith.cmpi slt, %117, %124 : vector<16x64xi32>
    %126 = arith.andi %120, %125 : vector<16x64xi1>
    %cst_62 = arith.constant 0xFF800000 : f32
    %127 = vector.broadcast %cst_62 : f32 to vector<16x64xf32>
    %128 = arith.select %126, %115, %127 : vector<16x64xi1>, vector<16x64xf32>
    %cst_63 = arith.constant dense<0xFF800000> : vector<16xf32>
    %129 = vector.multi_reduction <maximumf>, %128, %cst_63 [1] : vector<16x64xf32> to vector<16xf32>
    %130 = vector.shape_cast %129 : vector<16xf32> to vector<16x1xf32>
    %131 = arith.maximumf %130, %112 : vector<16x1xf32>
    %132 = arith.subf %112, %131 : vector<16x1xf32>
    %133 = math.exp %132 : vector<16x1xf32>
    %134 = vector.broadcast %131 : vector<16x1xf32> to vector<16x64xf32>
    %135 = arith.subf %128, %134 : vector<16x64xf32>
    %136 = math.exp %135 : vector<16x64xf32>
    %cst_64 = arith.constant dense<0.000000e+00> : vector<16xf32>
    %137 = vector.multi_reduction <add>, %136, %cst_64 [1] : vector<16x64xf32> to vector<16xf32>
    %138 = vector.shape_cast %137 : vector<16xf32> to vector<16x1xf32>
    %139 = arith.addf %133, %138 : vector<16x1xf32>
    %140 = math.log %139 : vector<16x1xf32>
    %141 = arith.addf %140, %131 : vector<16x1xf32>
    %142 = arith.subf %141, %112 : vector<16x1xf32>
    %143 = vector.shape_cast %142 : vector<16x1xf32> to vector<1x16x1xf32>
    %cst_65 = arith.constant dense<0.000000e+00> : vector<1xf32>
    %144 = vector.multi_reduction <add>, %143, %cst_65 [1, 2] : vector<1x16x1xf32> to vector<1xf32>
    %145 = vector.shape_cast %144 : vector<1xf32> to vector<1x1x1xf32>
    %146 = vector.extract %145[0, 0, 0] : f32 from vector<1x1x1xf32>
    %cst_66 = arith.constant 6.250000e-02 : f32
    %147 = arith.mulf %146, %cst_66 : f32
    %148 = arith.addf %106, %147 : f32
    %149 = vector.broadcast %148 : f32 to vector<1x1xf32>
    %c0_67 = arith.constant 0 : index
    %c0_68 = arith.constant 0 : index
    %150 = vector.load %arg15[%c0_67, %c0_68] : memref<1x1xf32, #tpu.memory_space<vmem>>, vector<1x1xf32>
    tpu.vector_store %arg15[%c0_67, %c0_68], %149 {strides = array<i32>} : memref<1x1xf32, #tpu.memory_space<vmem>>, vector<1x1xf32>,
    return
  }
  func.func @transform_0(%arg0: i32) -> (i32, i32) {
    %c0_i32 = arith.constant 0 : i32
    %c0_i32_0 = arith.constant 0 : i32
    %c0_i32_1 = arith.constant 0 : i32
    return %c0_i32, %c0_i32_0 : i32, i32
  }
  func.func @transform_1(%arg0: i32) -> (i32, i32) {
    %c0_i32 = arith.constant 0 : i32
    %c0_i32_0 = arith.constant 0 : i32
    %c0_i32_1 = arith.constant 0 : i32
    return %c0_i32, %c0_i32_0 : i32, i32
  }
  func.func @transform_2(%arg0: i32) -> (i32, i32) {
    %c0_i32 = arith.constant 0 : i32
    %c0_i32_0 = arith.constant 0 : i32
    %c0_i32_1 = arith.constant 0 : i32
    return %c0_i32, %c0_i32_0 : i32, i32
  }
  func.func @transform_3(%arg0: i32) -> (i32, i32) {
    %c0_i32 = arith.constant 0 : i32
    %c0_i32_0 = arith.constant 0 : i32
    %c0_i32_1 = arith.constant 0 : i32
    return %c0_i32, %c0_i32_0 : i32, i32
  }
  func.func @transform_4(%arg0: i32) -> (i32, i32) {
    %c0_i32 = arith.constant 0 : i32
    %c0_i32_0 = arith.constant 0 : i32
    %c0_i32_1 = arith.constant 0 : i32
    return %c0_i32, %c0_i32_0 : i32, i32
  }
  func.func @transform_5(%arg0: i32) -> (i32, i32) {
    %c0_i32 = arith.constant 0 : i32
    %c0_i32_0 = arith.constant 0 : i32
    %c0_i32_1 = arith.constant 0 : i32
    return %c0_i32, %c0_i32_0 : i32, i32
  }
  func.func @transform_6(%arg0: i32) -> (i32, i32) {
    %c0_i32 = arith.constant 0 : i32
    %c0_i32_0 = arith.constant 0 : i32
    %c0_i32_1 = arith.constant 0 : i32
    return %c0_i32, %c0_i32_0 : i32, i32
  }
  func.func @transform_7(%arg0: i32) -> (i32, i32) {
    %c0_i32 = arith.constant 0 : i32
    %c0_i32_0 = arith.constant 0 : i32
    %c0_i32_1 = arith.constant 0 : i32
    return %c0_i32, %c0_i32_0 : i32, i32
  }
  func.func @transform_8(%arg0: i32) -> (i32, i32) {
    %c0_i32 = arith.constant 0 : i32
    %c0_i32_0 = arith.constant 0 : i32
    %c0_i32_1 = arith.constant 0 : i32
    return %c0_i32, %c0_i32_0 : i32, i32
  }
  func.func @transform_9(%arg0: i32) -> (i32, i32) {
    %c0_i32 = arith.constant 0 : i32
    %c0_i32_0 = arith.constant 0 : i32
    %c0_i32_1 = arith.constant 0 : i32
    return %c0_i32, %c0_i32_0 : i32, i32
  }
  func.func @transform_10(%arg0: i32) -> (i32, i32) {
    %c0_i32 = arith.constant 0 : i32
    %c0_i32_0 = arith.constant 0 : i32
    %c0_i32_1 = arith.constant 0 : i32
    return %c0_i32, %c0_i32_0 : i32, i32
  }
  func.func @transform_11(%arg0: i32) -> (i32, i32) {
    %c0_i32 = arith.constant 0 : i32
    %c0_i32_0 = arith.constant 0 : i32
    %c0_i32_1 = arith.constant 0 : i32
    return %c0_i32, %c0_i32_0 : i32, i32
  }
  func.func @transform_12(%arg0: i32) -> (i32, i32) {
    %c0_i32 = arith.constant 0 : i32
    %c0_i32_0 = arith.constant 0 : i32
    %c0_i32_1 = arith.constant 0 : i32
    return %c0_i32, %c0_i32_0 : i32, i32
  }
  func.func @transform_13(%arg0: i32) -> (i32, i32) {
    %c0_i32 = arith.constant 0 : i32
    %c0_i32_0 = arith.constant 0 : i32
    %c0_i32_1 = arith.constant 0 : i32
    return %c0_i32, %c0_i32_0 : i32, i32
  }
  func.func @transform_14(%arg0: i32) -> (i32, i32) {
    %c0_i32 = arith.constant 0 : i32
    %c0_i32_0 = arith.constant 0 : i32
    %c0_i32_1 = arith.constant 0 : i32
    return %c0_i32, %c0_i32_0 : i32, i32
  }
}

</mosaic_0001>

<llo_original>
// kernel: gnn_loss.4
$region0: #{gnn_loss.4}
  #allocation0 [shape = 'u32[]', space=smem, size = 0x4, offset = 0x4, fixed_abs, tag = 'smem constant byte address 0x4 - core index']
  #allocation1 [shape = 'u32[72,128]{1,0:T(1,128)}', space=vmem, size = 0x9000, scoped, tag = 'internal scratch']
  %s0 = inlined_call_operand.vmem [shape: f32[2,16,10], index: 0, kind: input, shape index: {}]
  %s1 = inlined_call_operand.vmem [shape: f32[2,16,16], index: 1, kind: output, shape index: {}]
  %s2 = sld [smem:[#allocation0]]
  $region37: #{gnn_loss.4} parent=0
    _
  %s4 = ssub.s32 1, %s2
  %s5 = scalar_select 0, %s4, %s2
  loop: start=0, step=1, limit=4
  $region2: #{gnn_loss.4} parent=0 // loop_pre_header
    _
  $region3: #{gnn_loss.4} parent=0 // loop_header
    %s7 = sphi 0, %s11
    %p8 = scmp.ge.s32.totalorder %s7, 4
    %s17 = sphi 0, %s19
    %s20 = sphi 0, %s17
    %s21 = sphi 0, %s20
    %s37 = sphi 0, %s21
    %s43 = sphi 0, %s45
    %s46 = sphi 0, %s43
    %s47 = sphi 0, %s46
    %s63 = sphi 0, %s47
  $region4: #{gnn_loss.4} parent=0 // loop_header_branch
    %10 = sbr.rel (%p8) target = $region8
  $region5: #{gnn_loss.4} parent=0 // loop_body
    %s12 = ssub.s32 %s7, 1
    %s13 = ssub.s32 %s7, 2
    %s14 = sadd.s32 %s7, 1
    %s15 = ssub.s32 %s7, %s14
    %p16 = scmp.eq.s32.totalorder %s15, 0
    %s18 = sadd.s32 %s17, 1
    %s19 = scalar_select %p16, %s17, %s18
    %p22 = pneg %p16
    %p23 = scmp.eq.s32.totalorder %s7, 1
    %p24 = por %p22, %p23
    %p25 = scmp.ne.s32.totalorder %s17, %s20
    %p26 = scmp.eq.s32.totalorder %s7, 0
    %p27 = por %p25, %p26
    %p28 = scmp.ne.s32.totalorder %s17, %s20
    %p29 = scmp.eq.s32.totalorder %s12, 1
    %p30 = por %p28, %p29
    %p31 = scmp.ne.s32.totalorder %s20, %s21
    %p32 = scmp.eq.s32.totalorder %s12, 0
    %p33 = por %p31, %p32
    %p34 = scmp.ne.s32.totalorder %s20, %s21
    %p35 = scmp.eq.s32.totalorder %s13, 1
    %p36 = por %p34, %p35
    %p38 = scmp.ne.s32.totalorder %s21, %s37
    %p39 = scmp.eq.s32.totalorder %s13, 0
    %p40 = por %p38, %p39
    %s41 = ssub.s32 %s7, %s14
    %p42 = scmp.eq.s32.totalorder %s41, 0
    %s44 = sadd.s32 %s43, 1
    %s45 = scalar_select %p42, %s43, %s44
    %p48 = pneg %p42
    %p49 = scmp.eq.s32.totalorder %s7, 1
    %p50 = por %p48, %p49
    %p51 = scmp.ne.s32.totalorder %s43, %s46
    %p52 = scmp.eq.s32.totalorder %s7, 0
    %p53 = por %p51, %p52
    %p54 = scmp.ne.s32.totalorder %s43, %s46
    %p55 = scmp.eq.s32.totalorder %s12, 1
    %p56 = por %p54, %p55
    %p57 = scmp.ne.s32.totalorder %s46, %s47
    %p58 = scmp.eq.s32.totalorder %s12, 0
    %p59 = por %p57, %p58
    %p60 = scmp.ne.s32.totalorder %s46, %s47
    %p61 = scmp.eq.s32.totalorder %s13, 1
    %p62 = por %p60, %p61
    %p64 = scmp.ne.s32.totalorder %s47, %s63
    %p65 = scmp.eq.s32.totalorder %s13, 0
    %p66 = por %p64, %p65
    %p67 = scmp.le.s32.totalorder 1, %s7
    %p68 = scmp.lt.s32.totalorder %s7, 3
    %p69 = pnand %p67, %p68
    %p70 = pneg %p69
    // Predicated region
    $region9: #{gnn_loss.4} parent=5 // pred_check
      _
    $region10: #{gnn_loss.4} parent=5 // pred_check_branch
      %72 = sbr.rel (%p69) target = $region12
    $region11: #{gnn_loss.4} parent=5 // pred_region
      %s73 = ssub.s32 %s7, 1
    $region12: #{gnn_loss.4} parent=5 // pred_fallthru
      _
    %p74 = scmp.lt.s32.totalorder %s7, 2
    // Predicated region
    $region13: #{gnn_loss.4} parent=5 // pred_check
      %p75 = pneg %p74
    $region14: #{gnn_loss.4} parent=5 // pred_check_branch
      %77 = sbr.rel (%p75) target = $region16
    $region15: #{gnn_loss.4} parent=5 // pred_region
      // Predicated region
      $region17: #{gnn_loss.4} parent=15 // pred_check
        %p78 = pneg %p27
      $region18: #{gnn_loss.4} parent=15 // pred_check_branch
        %80 = sbr.rel (%p78) target = $region20
      $region19: #{gnn_loss.4} parent=15 // pred_region
        %p81 = scmp.lt.s32.totalorder %s7, 1
        %s82 = scalar_select %p81, %s7, 1
        %s83 = smul.addr %s82, 2
        %s84 = smul.addr %s83, 8
        %s85 = scalar_lea.vmem %s0, %s84
      $region20: #{gnn_loss.4} parent=15 // pred_fallthru
        _
    $region16: #{gnn_loss.4} parent=5 // pred_fallthru
      _
    %p86 = scmp.le.s32.totalorder 1, %s7
    %p87 = scmp.lt.s32.totalorder %s7, 3
    %p88 = pnand %p86, %p87
    %p89 = pneg %p88
    // Predicated region
    $region21: #{gnn_loss.4} parent=5 // pred_check
      _
    $region22: #{gnn_loss.4} parent=5 // pred_check_branch
      %91 = sbr.rel (%p88) target = $region24
    $region23: #{gnn_loss.4} parent=5 // pred_region
      %s92 = ssub.s32 %s7, 1
      %p93 = scmp.lt.s32.totalorder %s12, 1
      %s94 = scalar_select %p93, %s12, 1
      %s95 = smul.addr %s94, 2
      %s96 = smul.addr %s95, 8
      %s97 = scalar_lea.vmem %s0, %s96
      %p98 = pneg %p33
      %p99 = pneg %p30
      %p100 = pneg %p59
      %p101 = pneg %p56
      %p102 = scmp.lt.s32.totalorder %s12, 1
      %s103 = scalar_select %p102, %s12, 1
      %s104 = smul.addr %s103, 2
      %s105 = smul.addr %s104, 8
      %s106 = scalar_lea.vmem %s1, %s105
      %p107 = scmp.lt.s32.totalorder %s12, 1
      %s108 = scalar_select %p107, %s12, 1
      %s109 = smul.addr %s108, 2
      %s110 = smul.addr %s109, 8
      %s111 = scalar_lea.vmem %s0, %s110
      %p112 = scmp.lt.s32.totalorder %s12, 1
      %s113 = scalar_select %p112, %s12, 1
      %s114 = smul.addr %s113, 2
      %s115 = smul.addr %s114, 8
      %s116 = scalar_lea.vmem %s1, %s115
      %v117 = vld [vmem:[%s111] sm:$0xff]
      %v118 = vld [vmem:[%s111 + $0x8] sm:$0xff]
      %vm119 = vcmask 80896
      %v120 = vsel %vm119, %v117, -inf
      %121 = vmax.xlane.f32.xlu0 %v120
      %v122 = vpop.xlane.xlu0 %121
      %v123 = vsel %vm119, %v118, -inf
      %124 = vmax.xlane.f32.xlu0 %v123
      %v125 = vpop.xlane.xlu0 %124
      %v126 = vsub.f32 %v117, %v122
      %v127 = vsub.f32 %v118, %v125
      %v128 = vmul.f32 %v126, 1.442695
      %v129 = vpow.pop %v128
      %v130 = vmul.f32 %v127, 1.442695
      %v131 = vpow.pop %v130
      %v132 = vsel %vm119, %v129, 0.0
      %133 = vadd.xlane.f32.xlu0 %v132
      %v134 = vpop.xlane.xlu0 %133
      %v135 = vsel %vm119, %v131, 0.0
      %136 = vadd.xlane.f32.xlu0 %v135
      %v137 = vpop.xlane.xlu0 %136
      %v138 = vrcp.pop %v134
      %v139 = vmul.f32 %v134, %v138
      %v140 = vsub.f32 1.0, %v139
      %v141 = vmul.f32 %v138, %v140
      %v142 = vadd.f32 %v138, %v141
      %vm143 = vweird.f32 %v134
      %vm144 = vweird.f32 %v138
      %vm145 = vmor %vm143, %vm144
      %v146 = vsel %vm145, %v138, %v142
      %v147 = vand.u32 2147483647, %v134
      %vm148 = vcmp.eq.f32.partialorder %v147, 8.507059e+37
      %v149 = vand.u32 %v134, 2147483648
      %v150 = vor.u32 1.1754944e-38, %v149
      %v151 = vsel %vm148, %v150, %v146
      %v152 = vmul.f32 %v129, %v151
      %v153 = vrcp.pop %v137
      %v154 = vmul.f32 %v137, %v153
      %v155 = vsub.f32 1.0, %v154
      %v156 = vmul.f32 %v153, %v155
      %v157 = vadd.f32 %v153, %v156
      %vm158 = vweird.f32 %v137
      %vm159 = vweird.f32 %v153
      %vm160 = vmor %vm158, %vm159
      %v161 = vsel %vm160, %v153, %v157
      %v162 = vand.u32 2147483647, %v137
      %vm163 = vcmp.eq.f32.partialorder %v162, 8.507059e+37
      %v164 = vand.u32 %v137, 2147483648
      %v165 = vor.u32 1.1754944e-38, %v164
      %v166 = vsel %vm163, %v165, %v161
      %v167 = vmul.f32 %v131, %v166
      %v168 = vmul.f32 %v152, %v152
      %v169 = vmul.f32 %v167, %v167
      %v170 = vsel %vm119, %v168, 0.0
      %171 = vadd.xlane.f32.xlu0 %v170
      %v172 = vpop.xlane.xlu0 %171
      %v173 = vsel %vm119, %v169, 0.0
      %174 = vadd.xlane.f32.xlu0 %v173
      %v175 = vpop.xlane.xlu0 %174
      %v176 = vmax.f32 %v172, 1e-07
      %v177 = vmax.f32 %v175, 1e-07
      %v178 = vrsqrt.pop %v176
      %v179 = vmul.f32 %v178, %v176
      %v180 = vmul.f32 %v179, %v178
      %v181 = vmul.f32 0.5, %v180
      %v182 = vsub.f32 1.5, %v181
      %v183 = vmul.f32 %v178, %v182
      %vm184 = vweird.f32 %v176
      %vm185 = vweird.f32 %v178
      %vm186 = vmor %vm184, %vm185
      %v187 = vsel %vm186, %v178, %v183
      %v188 = vrsqrt.pop %v177
      %v189 = vmul.f32 %v188, %v177
      %v190 = vmul.f32 %v189, %v188
      %v191 = vmul.f32 0.5, %v190
      %v192 = vsub.f32 1.5, %v191
      %v193 = vmul.f32 %v188, %v192
      %vm194 = vweird.f32 %v177
      %vm195 = vweird.f32 %v188
      %vm196 = vmor %vm194, %vm195
      %v197 = vsel %vm196, %v188, %v193
      %v198 = vmul.f32 %v152, %v187
      %v199 = vmul.f32 %v167, %v197
      %v201 = vsel %vm119, %v198, 0
      %v204 = vsel %vm119, %v199, 0
      %206 = vmatpush.xpose.msra.mxu0 0.0
      %207 = vmatpush.xpose.msra.mxu0 0.0
      %208 = vmatpush.xpose.msra.mxu0 0.0
      %209 = vmatpush.xpose.msra.mxu0 0.0
      %210 = vmatpush.xpose.msra.mxu0 0.0
      %211 = vmatpush.xpose.msra.mxu0 0.0
      %212 = vmatpush.xpose.msra.mxu0 0.0
      %213 = vmatpush.xpose.msra.mxu0 0.0
      %214 = vmatpush.xpose.msra.mxu0 0.0
      %215 = vmatpush.xpose.msra.mxu0 0.0
      %216 = vmatpush.xpose.msra.mxu0 0.0
      %217 = vmatpush.xpose.msra.mxu0 0.0
      %218 = vmatpush.xpose.msra.mxu0 0.0
      %219 = vmatpush.xpose.msra.mxu0 0.0
      %220 = vmatpush.xpose.msra.mxu0 %v204
      %221 = vmatpush.xpose.msra.mxu0 %v201
      %222 = vmatmul.f32.gmra.mxu0 %v201
      %v223 = vpop.f32.mrf.mxu0
      %v224 = vadd.f32 0.0, %v223
      %225 = vmatmul.f32.gmra.mxu0 %v204
      %v226 = vpop.f32.mrf.mxu0
      %v227 = vadd.f32 0.0, %v226
      %228 = vdwg.mxu0
      %v229 = vsub.f32 1.0, %v224
      %v230 = vsub.f32 1.0, %v227
      %vm231 = vcmask 130048
      %232 = vst.msk [vmem:[%s116] sm:$0xff] %vm231, %v229
      %233 = vst.msk [vmem:[%s116 + $0x8] sm:$0xff] %vm231, %v230
      %p234 = scmp.lt.s32.totalorder %s12, 1
      %s235 = scalar_select %p234, %s12, 1
      %s236 = smul.addr %s235, 2
      %s237 = smul.addr %s236, 8
      %s238 = scalar_lea.vmem %s1, %s237
      // Predicated region
      $region25: #{gnn_loss.4} parent=23 // pred_check
        %p239 = pneg %p56
      $region26: #{gnn_loss.4} parent=23 // pred_check_branch
        %241 = sbr.rel (%p239) target = $region28
      $region27: #{gnn_loss.4} parent=23 // pred_region
        _
      $region28: #{gnn_loss.4} parent=23 // pred_fallthru
        _
    $region24: #{gnn_loss.4} parent=5 // pred_fallthru
      _
    %p242 = scmp.le.s32.totalorder 2, %s7
    // Predicated region
    $region29: #{gnn_loss.4} parent=5 // pred_check
      %p243 = pneg %p242
    $region30: #{gnn_loss.4} parent=5 // pred_check_branch
      %245 = sbr.rel (%p243) target = $region32
    $region31: #{gnn_loss.4} parent=5 // pred_region
      %s246 = ssub.s32 %s7, 2
      // Predicated region
      $region33: #{gnn_loss.4} parent=31 // pred_check
        %p247 = pneg %p62
      $region34: #{gnn_loss.4} parent=31 // pred_check_branch
        %249 = sbr.rel (%p247) target = $region36
      $region35: #{gnn_loss.4} parent=31 // pred_region
        %p250 = scmp.lt.s32.totalorder %s13, 1
        %s251 = scalar_select %p250, %s13, 1
        %s252 = smul.addr %s251, 2
        %s253 = smul.addr %s252, 8
        %s254 = scalar_lea.vmem %s1, %s253
      $region36: #{gnn_loss.4} parent=31 // pred_fallthru
        _
    $region32: #{gnn_loss.4} parent=5 // pred_fallthru
      _
  $region6: #{gnn_loss.4} parent=0 // loop_footer
    %s11 = sadd.s32 1, %s7
  $region7: #{gnn_loss.4} parent=0 // loop_footer_branch
    %6 = sbr.rel target = $region3
  $region8: #{gnn_loss.4} parent=0 // loop_exit
    _

// kernel: gnn_loss.3
$region0: #{gnn_loss.3}
  #allocation0 [shape = 'u32[]', space=smem, size = 0x4, offset = 0x4, fixed_abs, tag = 'smem constant byte address 0x4 - core index']
  #allocation1 [shape = 'u32[72,128]{1,0:T(1,128)}', space=vmem, size = 0x9000, scoped, tag = 'internal scratch']
  %s0 = inlined_call_operand.vmem [shape: f32[16,32], index: 0, kind: input, shape index: {}]
  %s1 = inlined_call_operand.vmem [shape: f32[32,128], index: 1, kind: input, shape index: {}]
  %s2 = inlined_call_operand.vmem [shape: f32[1,128], index: 2, kind: input, shape index: {}]
  %s3 = inlined_call_operand.vmem [shape: f32[16,48], index: 3, kind: input, shape index: {}]
  %s4 = inlined_call_operand.vmem [shape: f32[48,128], index: 4, kind: input, shape index: {}]
  %s5 = inlined_call_operand.vmem [shape: f32[1,128], index: 5, kind: input, shape index: {}]
  %s6 = inlined_call_operand.vmem [shape: f32[16,128], index: 6, kind: input, shape index: {}]
  %s7 = inlined_call_operand.vmem [shape: f32[16,128], index: 7, kind: input, shape index: {}]
  %s8 = inlined_call_operand.vmem [shape: f32[64,128], index: 8, kind: input, shape index: {}]
  %s9 = inlined_call_operand.vmem [shape: f32[64,128], index: 9, kind: input, shape index: {}]
  %s10 = inlined_call_operand.vmem [shape: f32[16,128], index: 10, kind: output, shape index: {0}]
  %s11 = inlined_call_operand.vmem [shape: f32[16,128], index: 11, kind: output, shape index: {1}]
  %s12 = inlined_call_operand.hbm [shape: f32[1,1], index: 12, kind: output, shape index: {2}]
  %13 = xla_tuple %s10, %s11, %s12
  %s14 = sld [smem:[#allocation0]]
  $region66: #{gnn_loss.3} parent=0
    _
  %s16 = ssub.s32 1, %s14
  %s17 = scalar_select 0, %s16, %s14
  $region1: #{gnn_loss.3} parent=0
    #allocation2 [shape = 'u8[512]{0}', space=vmem, size = 0x400, scoped, tag = 'output window, operand 2, single buffered']
    #allocation3 [shape = 's32[1]{0}', space=sflag, size = 0x4, scoped, tag = 'scoped memory for gnn_loss.3']
    %18 = vsyncpa [#allocation3], 0
    // Predicated region
    $region2: #{gnn_loss.3} parent=1 // pred_check
      _
    $region3: #{gnn_loss.3} parent=1 // pred_check_branch
      %20 = sbr.rel (0) target = $region5
    $region4: #{gnn_loss.3} parent=1 // pred_region
      _
    $region5: #{gnn_loss.3} parent=1 // pred_fallthru
      _
    // Predicated region
    $region6: #{gnn_loss.3} parent=1 // pred_check
      _
    $region7: #{gnn_loss.3} parent=1 // pred_check_branch
      %22 = sbr.rel (0) target = $region9
    $region8: #{gnn_loss.3} parent=1 // pred_region
      _
    $region9: #{gnn_loss.3} parent=1 // pred_fallthru
      _
    // Predicated region
    $region10: #{gnn_loss.3} parent=1 // pred_check
      _
    $region11: #{gnn_loss.3} parent=1 // pred_check_branch
      %24 = sbr.rel (0) target = $region13
    $region12: #{gnn_loss.3} parent=1 // pred_region
      _
    $region13: #{gnn_loss.3} parent=1 // pred_fallthru
      _
    // Predicated region
    $region14: #{gnn_loss.3} parent=1 // pred_check
      _
    $region15: #{gnn_loss.3} parent=1 // pred_check_branch
      %26 = sbr.rel (0) target = $region17
    $region16: #{gnn_loss.3} parent=1 // pred_region
      _
    $region17: #{gnn_loss.3} parent=1 // pred_fallthru
      _
    // Predicated region
    $region18: #{gnn_loss.3} parent=1 // pred_check
      _
    $region19: #{gnn_loss.3} parent=1 // pred_check_branch
      %28 = sbr.rel (0) target = $region21
    $region20: #{gnn_loss.3} parent=1 // pred_region
      _
    $region21: #{gnn_loss.3} parent=1 // pred_fallthru
      _
    // Predicated region
    $region22: #{gnn_loss.3} parent=1 // pred_check
      _
    $region23: #{gnn_loss.3} parent=1 // pred_check_branch
      %30 = sbr.rel (0) target = $region25
    $region24: #{gnn_loss.3} parent=1 // pred_region
      _
    $region25: #{gnn_loss.3} parent=1 // pred_fallthru
      _
    // Predicated region
    $region26: #{gnn_loss.3} parent=1 // pred_check
      _
    $region27: #{gnn_loss.3} parent=1 // pred_check_branch
      %32 = sbr.rel (0) target = $region29
    $region28: #{gnn_loss.3} parent=1 // pred_region
      _
    $region29: #{gnn_loss.3} parent=1 // pred_fallthru
      _
    // Predicated region
    $region30: #{gnn_loss.3} parent=1 // pred_check
      _
    $region31: #{gnn_loss.3} parent=1 // pred_check_branch
      %34 = sbr.rel (0) target = $region33
    $region32: #{gnn_loss.3} parent=1 // pred_region
      _
    $region33: #{gnn_loss.3} parent=1 // pred_fallthru
      _
    // Predicated region
    $region34: #{gnn_loss.3} parent=1 // pred_check
      _
    $region35: #{gnn_loss.3} parent=1 // pred_check_branch
      %36 = sbr.rel (0) target = $region37
    $region36: #{gnn_loss.3} parent=1 // pred_region
      _
    $region37: #{gnn_loss.3} parent=1 // pred_fallthru
      _
    // Predicated region
    $region38: #{gnn_loss.3} parent=1 // pred_check
      _
    $region39: #{gnn_loss.3} parent=1 // pred_check_branch
      %38 = sbr.rel (0) target = $region41
    $region40: #{gnn_loss.3} parent=1 // pred_region
      _
    $region41: #{gnn_loss.3} parent=1 // pred_fallthru
      _
    %v39 = vld [vmem:[%s0] sm:$0xff]
    %v40 = vld [vmem:[%s0 + $0x8] sm:$0xff]
    %v41 = vld [vmem:[%s1] sm:$0xff]
    %v42 = vld [vmem:[%s1 + $0x8] sm:$0xff]
    %v43 = vld [vmem:[%s1 + $0x10] sm:$0xff]
    %v44 = vld [vmem:[%s1 + $0x18] sm:$0xff]
    %v45 = vld [vmem:[%s2] sm:$0x1]
    %v47 = vperm.slane %v45, 0
    %vm49 = vcmask 261120
    %v51 = vsel %vm49, %v39, 0
    %v54 = vsel %vm49, %v40, 0
    %56 = vmatpush.msra.mxu0 0.0
    %57 = vmatpush.msra.mxu0 0.0
    %58 = vmatpush.msra.mxu0 0.0
    %59 = vmatpush.msra.mxu0 0.0
    %60 = vmatpush.msra.mxu0 0.0
    %61 = vmatpush.msra.mxu0 0.0
    %62 = vmatpush.msra.mxu0 0.0
    %63 = vmatpush.msra.mxu0 0.0
    %64 = vmatpush.msra.mxu0 0.0
    %65 = vmatpush.msra.mxu0 0.0
    %66 = vmatpush.msra.mxu0 0.0
    %67 = vmatpush.msra.mxu0 0.0
    %68 = vmatpush.msra.mxu0 %v44
    %69 = vmatpush.msra.mxu0 %v43
    %70 = vmatpush.msra.mxu0 %v42
    %71 = vmatpush.msra.mxu0 %v41
    %72 = vmatmul.f32.gmra.mxu0 %v51
    %v73 = vpop.f32.mrf.mxu0
    %v74 = vadd.f32 %v47, %v73
    %75 = vmatmul.f32.gmra.mxu0 %v54
    %v76 = vpop.f32.mrf.mxu0
    %v77 = vadd.f32 %v47, %v76
    %78 = vdwg.mxu0
    %v79 = vmul.f32 %v74, %v74
    %v80 = vmul.f32 %v77, %v77
    %81 = vadd.xlane.f32.xlu0 %v79
    %v82 = vpop.xlane.xlu0 %81
    %83 = vadd.xlane.f32.xlu0 %v80
    %v84 = vpop.xlane.xlu0 %83
    %v85 = vmax.f32 %v82, 1e-12
    %v86 = vmax.f32 %v84, 1e-12
    %v87 = vrsqrt.pop %v85
    %v88 = vmul.f32 %v87, %v85
    %v89 = vmul.f32 %v88, %v87
    %v90 = vmul.f32 0.5, %v89
    %v91 = vsub.f32 1.5, %v90
    %v92 = vmul.f32 %v87, %v91
    %vm93 = vweird.f32 %v85
    %vm94 = vweird.f32 %v87
    %vm95 = vmor %vm93, %vm94
    %v96 = vsel %vm95, %v87, %v92
    %v97 = vrsqrt.pop %v86
    %v98 = vmul.f32 %v97, %v86
    %v99 = vmul.f32 %v98, %v97
    %v100 = vmul.f32 0.5, %v99
    %v101 = vsub.f32 1.5, %v100
    %v102 = vmul.f32 %v97, %v101
    %vm103 = vweird.f32 %v86
    %vm104 = vweird.f32 %v97
    %vm105 = vmor %vm103, %vm104
    %v106 = vsel %vm105, %v97, %v102
    %v107 = vmul.f32 %v74, %v96
    %v108 = vmul.f32 %v77, %v106
    %v109 = vld [vmem:[%s3] sm:$0xff]
    %v110 = vld [vmem:[%s3 + $0x8] sm:$0xff]
    %v111 = vld [vmem:[%s4] sm:$0xff]
    %v112 = vld [vmem:[%s4 + $0x8] sm:$0xff]
    %v113 = vld [vmem:[%s4 + $0x10] sm:$0xff]
    %v114 = vld [vmem:[%s4 + $0x18] sm:$0xff]
    %v115 = vld [vmem:[%s4 + $0x20] sm:$0xff]
    %v116 = vld [vmem:[%s4 + $0x28] sm:$0xff]
    %v117 = vld [vmem:[%s5] sm:$0x1]
    %v119 = vperm.slane %v117, 0
    %vm121 = vcmask 392192
    %v123 = vsel %vm121, %v109, 0
    %v126 = vsel %vm121, %v110, 0
    %128 = vmatpush.msra.mxu0 0.0
    %129 = vmatpush.msra.mxu0 0.0
    %130 = vmatpush.msra.mxu0 0.0
    %131 = vmatpush.msra.mxu0 0.0
    %132 = vmatpush.msra.mxu0 0.0
    %133 = vmatpush.msra.mxu0 0.0
    %134 = vmatpush.msra.mxu0 0.0
    %135 = vmatpush.msra.mxu0 0.0
    %136 = vmatpush.msra.mxu0 0.0
    %137 = vmatpush.msra.mxu0 0.0
    %138 = vmatpush.msra.mxu0 %v116
    %139 = vmatpush.msra.mxu0 %v115
    %140 = vmatpush.msra.mxu0 %v114
    %141 = vmatpush.msra.mxu0 %v113
    %142 = vmatpush.msra.mxu0 %v112
    %143 = vmatpush.msra.mxu0 %v111
    %144 = vmatmul.f32.gmra.mxu0 %v123
    %v145 = vpop.f32.mrf.mxu0
    %v146 = vadd.f32 %v119, %v145
    %147 = vmatmul.f32.gmra.mxu0 %v126
    %v148 = vpop.f32.mrf.mxu0
    %v149 = vadd.f32 %v119, %v148
    %150 = vdwg.mxu0
    %v151 = vmul.f32 %v146, %v146
    %v152 = vmul.f32 %v149, %v149
    %153 = vadd.xlane.f32.xlu0 %v151
    %v154 = vpop.xlane.xlu0 %153
    %155 = vadd.xlane.f32.xlu0 %v152
    %v156 = vpop.xlane.xlu0 %155
    %v157 = vmax.f32 %v154, 1e-12
    %v158 = vmax.f32 %v156, 1e-12
    %v159 = vrsqrt.pop %v157
    %v160 = vmul.f32 %v159, %v157
    %v161 = vmul.f32 %v160, %v159
    %v162 = vmul.f32 0.5, %v161
    %v163 = vsub.f32 1.5, %v162
    %v164 = vmul.f32 %v159, %v163
    %vm165 = vweird.f32 %v157
    %vm166 = vweird.f32 %v159
    %vm167 = vmor %vm165, %vm166
    %v168 = vsel %vm167, %v159, %v164
    %v169 = vrsqrt.pop %v158
    %v170 = vmul.f32 %v169, %v158
    %v171 = vmul.f32 %v170, %v169
    %v172 = vmul.f32 0.5, %v171
    %v173 = vsub.f32 1.5, %v172
    %v174 = vmul.f32 %v169, %v173
    %vm175 = vweird.f32 %v158
    %vm176 = vweird.f32 %v169
    %vm177 = vmor %vm175, %vm176
    %v178 = vsel %vm177, %v169, %v174
    %v179 = vmul.f32 %v146, %v168
    %v180 = vmul.f32 %v149, %v178
    %181 = vst [vmem:[%s10] sm:$0xff] %v107
    %182 = vst [vmem:[%s10 + $0x8] sm:$0xff] %v108
    %183 = vst [vmem:[%s11] sm:$0xff] %v179
    %184 = vst [vmem:[%s11 + $0x8] sm:$0xff] %v180
    %v185 = vld [vmem:[%s6] sm:$0xff]
    %v186 = vld [vmem:[%s6 + $0x8] sm:$0xff]
    %v187 = vld [vmem:[%s8] sm:$0xff]
    %v188 = vld [vmem:[%s8 + $0x8] sm:$0xff]
    %v189 = vld [vmem:[%s8 + $0x10] sm:$0xff]
    %v190 = vld [vmem:[%s8 + $0x18] sm:$0xff]
    %v191 = vld [vmem:[%s8 + $0x20] sm:$0xff]
    %v192 = vld [vmem:[%s8 + $0x28] sm:$0xff]
    %v193 = vld [vmem:[%s8 + $0x30] sm:$0xff]
    %v194 = vld [vmem:[%s8 + $0x38] sm:$0xff]
    %v195 = vmul.f32 %v185, %v107
    %v196 = vmul.f32 %v186, %v108
    %197 = vadd.xlane.f32.xlu0 %v195
    %v198 = vpop.xlane.xlu0 %197
    %199 = vadd.xlane.f32.xlu0 %v196
    %v200 = vpop.xlane.xlu0 %199
    %v201 = vmul.f32 %v198, 14.285714
    %v202 = vmul.f32 %v200, 14.285714
    %203 = vmatpush.xpose.msra.mxu0 0.0
    %204 = vmatpush.xpose.msra.mxu0 0.0
    %205 = vmatpush.xpose.msra.mxu0 0.0
    %206 = vmatpush.xpose.msra.mxu0 0.0
    %207 = vmatpush.xpose.msra.mxu0 0.0
    %208 = vmatpush.xpose.msra.mxu0 0.0
    %209 = vmatpush.xpose.msra.mxu0 0.0
    %210 = vmatpush.xpose.msra.mxu0 0.0
    %211 = vmatpush.xpose.msra.mxu0 %v194
    %212 = vmatpush.xpose.msra.mxu0 %v193
    %213 = vmatpush.xpose.msra.mxu0 %v192
    %214 = vmatpush.xpose.msra.mxu0 %v191
    %215 = vmatpush.xpose.msra.mxu0 %v190
    %216 = vmatpush.xpose.msra.mxu0 %v189
    %217 = vmatpush.xpose.msra.mxu0 %v188
    %218 = vmatpush.xpose.msra.mxu0 %v187
    %219 = vmatmul.f32.gmra.mxu0 %v107
    %v220 = vpop.f32.mrf.mxu0
    %v221 = vadd.f32 0.0, %v220
    %222 = vmatmul.f32.gmra.mxu0 %v108
    %v223 = vpop.f32.mrf.mxu0
    %v224 = vadd.f32 0.0, %v223
    %225 = vdwg.mxu0
    %v226 = vmul.f32 %v221, 14.285714
    %v227 = vmul.f32 %v224, 14.285714
    %v228 = vlaneseq
    %v229 = vshrl.u32 %v228, 7
    %v230 = vadd.s32 %v229, 8
    %v231 = vlaneseq
    %v232 = vand.u32 %v231, 127
    %v233 = vmul.u32 %v229, 4
    %v234 = vmul.u32 %v230, 4
    %vm235 = vcmp.ge.s32.totalorder %v232, %v233
    %vm236 = vcmp.ge.s32.totalorder %v232, %v234
    %v237 = vadd.s32 %v233, 4
    %v238 = vadd.s32 %v234, 4
    %vm239 = vcmp.lt.s32.totalorder %v232, %v237
    %vm240 = vcmp.lt.s32.totalorder %v232, %v238
    %vm241 = vmand %vm235, %vm239
    %vm242 = vmand %vm236, %vm240
    %v243 = vsel %vm241, %v226, -inf
    %v244 = vsel %vm242, %v227, -inf
    %vm245 = vcmask 523264
    %v246 = vsel %vm245, %v243, -inf
    %247 = vmax.xlane.f32.xlu0 %v246
    %v248 = vpop.xlane.xlu0 %247
    %v249 = vsel %vm245, %v244, -inf
    %250 = vmax.xlane.f32.xlu0 %v249
    %v251 = vpop.xlane.xlu0 %250
    %v252 = vmax.f32 %v248, %v201
    %v253 = vmax.f32 %v251, %v202
    %v254 = vsub.f32 %v201, %v252
    %v255 = vsub.f32 %v202, %v253
    %v256 = vmul.f32 %v254, 1.442695
    %v257 = vpow.pop %v256
    %v258 = vmul.f32 %v255, 1.442695
    %v259 = vpow.pop %v258
    %v260 = vsub.f32 %v243, %v252
    %v261 = vsub.f32 %v244, %v253
    %v262 = vmul.f32 %v260, 1.442695
    %v263 = vpow.pop %v262
    %v264 = vmul.f32 %v261, 1.442695
    %v265 = vpow.pop %v264
    %v266 = vsel %vm245, %v263, 0.0
    %267 = vadd.xlane.f32.xlu0 %v266
    %v268 = vpop.xlane.xlu0 %267
    %v269 = vsel %vm245, %v265, 0.0
    %270 = vadd.xlane.f32.xlu0 %v269
    %v271 = vpop.xlane.xlu0 %270
    %v272 = vadd.f32 %v257, %v268
    %v273 = vadd.f32 %v259, %v271
    %v274 = vlog2.pop %v272
    %v275 = vmul.f32 %v274, 0.6931472
    %v276 = vlog2.pop %v273
    %v277 = vmul.f32 %v276, 0.6931472
    %v278 = vadd.f32 %v275, %v252
    %v279 = vadd.f32 %v277, %v253
    %v280 = vsub.f32 %v278, %v201
    %v281 = vsub.f32 %v279, %v202
    %vm282 = vcmask 7168
    %v283 = vsel %vm282, %v280, 0.0
    %v284 = vsel %vm282, %v281, 0.0
    %v285 = vadd.f32 %v283, %v284
    %286 = vadd.xlane.f32.xlu0 %v285
    %v287 = vpop.xlane.xlu0 %286
    %v288 = vrot.slane %v287, 4
    %v289 = vadd.f32 %v287, %v288
    %v290 = vrot.slane %v289, 2
    %v291 = vadd.f32 %v289, %v290
    %v292 = vrot.slane %v291, 1
    %v293 = vadd.f32 %v291, %v292
    %s294 = vtos %v293
    %s295 = smul.f32 %s294, 0.0625
    %v296 = vld [vmem:[%s7] sm:$0xff]
    %v297 = vld [vmem:[%s7 + $0x8] sm:$0xff]
    %v298 = vld [vmem:[%s9] sm:$0xff]
    %v299 = vld [vmem:[%s9 + $0x8] sm:$0xff]
    %v300 = vld [vmem:[%s9 + $0x10] sm:$0xff]
    %v301 = vld [vmem:[%s9 + $0x18] sm:$0xff]
    %v302 = vld [vmem:[%s9 + $0x20] sm:$0xff]
    %v303 = vld [vmem:[%s9 + $0x28] sm:$0xff]
    %v304 = vld [vmem:[%s9 + $0x30] sm:$0xff]
    %v305 = vld [vmem:[%s9 + $0x38] sm:$0xff]
    %v306 = vmul.f32 %v296, %v179
    %v307 = vmul.f32 %v297, %v180
    %308 = vadd.xlane.f32.xlu0 %v306
    %v309 = vpop.xlane.xlu0 %308
    %310 = vadd.xlane.f32.xlu0 %v307
    %v311 = vpop.xlane.xlu0 %310
    %v312 = vmul.f32 %v309, 14.285714
    %v313 = vmul.f32 %v311, 14.285714
    %314 = vmatpush.xpose.msra.mxu0 0.0
    %315 = vmatpush.xpose.msra.mxu0 0.0
    %316 = vmatpush.xpose.msra.mxu0 0.0
    %317 = vmatpush.xpose.msra.mxu0 0.0
    %318 = vmatpush.xpose.msra.mxu0 0.0
    %319 = vmatpush.xpose.msra.mxu0 0.0
    %320 = vmatpush.xpose.msra.mxu0 0.0
    %321 = vmatpush.xpose.msra.mxu0 0.0
    %322 = vmatpush.xpose.msra.mxu0 %v305
    %323 = vmatpush.xpose.msra.mxu0 %v304
    %324 = vmatpush.xpose.msra.mxu0 %v303
    %325 = vmatpush.xpose.msra.mxu0 %v302
    %326 = vmatpush.xpose.msra.mxu0 %v301
    %327 = vmatpush.xpose.msra.mxu0 %v300
    %328 = vmatpush.xpose.msra.mxu0 %v299
    %329 = vmatpush.xpose.msra.mxu0 %v298
    %330 = vmatmul.f32.gmra.mxu0 %v179
    %v331 = vpop.f32.mrf.mxu0
    %v332 = vadd.f32 0.0, %v331
    %333 = vmatmul.f32.gmra.mxu0 %v180
    %v334 = vpop.f32.mrf.mxu0
    %v335 = vadd.f32 0.0, %v334
    %336 = vdwg.mxu0
    %v337 = vmul.f32 %v332, 14.285714
    %v338 = vmul.f32 %v335, 14.285714
    %v339 = vsel %vm241, %v337, -inf
    %v340 = vsel %vm242, %v338, -inf
    %v341 = vsel %vm245, %v339, -inf
    %342 = vmax.xlane.f32.xlu0 %v341
    %v343 = vpop.xlane.xlu0 %342
    %v344 = vsel %vm245, %v340, -inf
    %345 = vmax.xlane.f32.xlu0 %v344
    %v346 = vpop.xlane.xlu0 %345
    %v347 = vmax.f32 %v343, %v312
    %v348 = vmax.f32 %v346, %v313
    %v349 = vsub.f32 %v312, %v347
    %v350 = vsub.f32 %v313, %v348
    %v351 = vmul.f32 %v349, 1.442695
    %v352 = vpow.pop %v351
    %v353 = vmul.f32 %v350, 1.442695
    %v354 = vpow.pop %v353
    %v355 = vsub.f32 %v339, %v347
    %v356 = vsub.f32 %v340, %v348
    %v357 = vmul.f32 %v355, 1.442695
    %v358 = vpow.pop %v357
    %v359 = vmul.f32 %v356, 1.442695
    %v360 = vpow.pop %v359
    %v361 = vsel %vm245, %v358, 0.0
    %362 = vadd.xlane.f32.xlu0 %v361
    %v363 = vpop.xlane.xlu0 %362
    %v364 = vsel %vm245, %v360, 0.0
    %365 = vadd.xlane.f32.xlu0 %v364
    %v366 = vpop.xlane.xlu0 %365
    %v367 = vadd.f32 %v352, %v363
    %v368 = vadd.f32 %v354, %v366
    %v369 = vlog2.pop %v367
    %v370 = vmul.f32 %v369, 0.6931472
    %v371 = vlog2.pop %v368
    %v372 = vmul.f32 %v371, 0.6931472
    %v373 = vadd.f32 %v370, %v347
    %v374 = vadd.f32 %v372, %v348
    %v375 = vsub.f32 %v373, %v312
    %v376 = vsub.f32 %v374, %v313
    %v377 = vsel %vm282, %v375, 0.0
    %v378 = vsel %vm282, %v376, 0.0
    %v379 = vadd.f32 %v377, %v378
    %380 = vadd.xlane.f32.xlu0 %v379
    %v381 = vpop.xlane.xlu0 %380
    %v382 = vrot.slane %v381, 4
    %v383 = vadd.f32 %v381, %v382
    %v384 = vrot.slane %v383, 2
    %v385 = vadd.f32 %v383, %v384
    %v386 = vrot.slane %v385, 1
    %v387 = vadd.f32 %v385, %v386
    %s388 = vtos %v387
    %s389 = smul.f32 %s388, 0.0625
    %s390 = sadd.f32 %s295, %s389
    %v391 = vstv %s390
    %vm392 = vcmask 0
    %393 = vst.msk [vmem:[#allocation2] sm:$0x1] %vm392, %v391
    // Predicated region
    $region42: #{gnn_loss.3} parent=1 // pred_check
      _
    $region43: #{gnn_loss.3} parent=1 // pred_check_branch
      %395 = sbr.rel (0) target = $region45
    $region44: #{gnn_loss.3} parent=1 // pred_region
      _
    $region45: #{gnn_loss.3} parent=1 // pred_fallthru
      _
    // Predicated region
    $region46: #{gnn_loss.3} parent=1 // pred_check
      _
    $region47: #{gnn_loss.3} parent=1 // pred_check_branch
      %397 = sbr.rel (0) target = $region49
    $region48: #{gnn_loss.3} parent=1 // pred_region
      _
    $region49: #{gnn_loss.3} parent=1 // pred_fallthru
      _
    // Predicated region
    $region50: #{gnn_loss.3} parent=1 // pred_check
      _
    $region51: #{gnn_loss.3} parent=1 // pred_check_branch
      %399 = sbr.rel (0) target = $region53
    $region52: #{gnn_loss.3} parent=1 // pred_region
      %401 = vsyncadd [#allocation3], 0
      %s403 = sshll.u32 [#allocation2], 4
      %s404 = int_to_ptr.vmem [resolvable:$true] %s403
      %s405 = sshll.u32 %s12, 4
      %s406 = int_to_ptr.hbm [resolvable:$true] %s405
      %408 = dma.vmem_to_hbm [thread:$0]  %s404, 16, %s406, [#allocation3]
    $region53: #{gnn_loss.3} parent=1 // pred_fallthru
      _
    // Predicated region
    $region54: #{gnn_loss.3} parent=1 // pred_check
      _
    $region55: #{gnn_loss.3} parent=1 // pred_check_branch
      %410 = sbr.rel (0) target = $region57
    $region56: #{gnn_loss.3} parent=1 // pred_region
      _
    $region57: #{gnn_loss.3} parent=1 // pred_fallthru
      _
    // Predicated region
    $region58: #{gnn_loss.3} parent=1 // pred_check
      _
    $region59: #{gnn_loss.3} parent=1 // pred_check_branch
      %412 = sbr.rel (0) target = $region61
    $region60: #{gnn_loss.3} parent=1 // pred_region
      _
    $region61: #{gnn_loss.3} parent=1 // pred_fallthru
      _
    // Predicated region
    $region62: #{gnn_loss.3} parent=1 // pred_check
      _
    $region63: #{gnn_loss.3} parent=1 // pred_check_branch
      %414 = sbr.rel (0) target = $region65
    $region64: #{gnn_loss.3} parent=1 // pred_region
      %416 = dma.done [#allocation3], 16
    $region65: #{gnn_loss.3} parent=1 // pred_fallthru
      _
    %417 = vsyncpa [#allocation3], 1

// kernel: gnn_loss.5
$region0: #{gnn_loss.5}
  #allocation0 [shape = 'u32[]', space=smem, size = 0x4, offset = 0x4, fixed_abs, tag = 'smem constant byte address 0x4 - core index']
  #allocation1 [shape = 'u32[72,128]{1,0:T(1,128)}', space=vmem, size = 0x9000, scoped, tag = 'internal scratch']
  %s0 = inlined_call_operand.vmem [shape: f32[16,16], index: 0, kind: input, shape index: {}]
  %s1 = inlined_call_operand.vmem [shape: f32[16,16], index: 1, kind: input, shape index: {}]
  %s2 = inlined_call_operand.vmem [shape: f32[16,128], index: 2, kind: input, shape index: {}]
  %s3 = inlined_call_operand.vmem [shape: f32[16,128], index: 3, kind: input, shape index: {}]
  %s4 = inlined_call_operand.vmem [shape: f32[128,128], index: 4, kind: input, shape index: {}]
  %s5 = inlined_call_operand.vmem [shape: f32[128,128], index: 5, kind: input, shape index: {}]
  %s6 = inlined_call_operand.vmem [shape: f32[1,128], index: 6, kind: input, shape index: {}]
  %s7 = inlined_call_operand.vmem [shape: f32[128,128], index: 7, kind: input, shape index: {}]
  %s8 = inlined_call_operand.vmem [shape: f32[128,128], index: 8, kind: input, shape index: {}]
  %s9 = inlined_call_operand.vmem [shape: f32[1,128], index: 9, kind: input, shape index: {}]
  %s10 = inlined_call_operand.vmem [shape: f32[16,128], index: 10, kind: input, shape index: {}]
  %s11 = inlined_call_operand.vmem [shape: f32[16,128], index: 11, kind: input, shape index: {}]
  %s12 = inlined_call_operand.vmem [shape: f32[64,128], index: 12, kind: input, shape index: {}]
  %s13 = inlined_call_operand.vmem [shape: f32[64,128], index: 13, kind: input, shape index: {}]
  %s14 = inlined_call_operand.hbm [shape: f32[1,1], index: 14, kind: output, shape index: {}]
  %s15 = sld [smem:[#allocation0]]
  $region66: #{gnn_loss.5} parent=0
    _
  %s17 = ssub.s32 1, %s15
  %s18 = scalar_select 0, %s17, %s15
  $region1: #{gnn_loss.5} parent=0
    #allocation2 [shape = 'u8[512]{0}', space=vmem, size = 0x400, scoped, tag = 'output window, operand 0, single buffered']
    #allocation3 [shape = 's32[1]{0}', space=sflag, size = 0x4, scoped, tag = 'scoped memory for gnn_loss.5']
    %19 = vsyncpa [#allocation3], 0
    // Predicated region
    $region2: #{gnn_loss.5} parent=1 // pred_check
      _
    $region3: #{gnn_loss.5} parent=1 // pred_check_branch
      %21 = sbr.rel (0) target = $region5
    $region4: #{gnn_loss.5} parent=1 // pred_region
      _
    $region5: #{gnn_loss.5} parent=1 // pred_fallthru
      _
    // Predicated region
    $region6: #{gnn_loss.5} parent=1 // pred_check
      _
    $region7: #{gnn_loss.5} parent=1 // pred_check_branch
      %23 = sbr.rel (0) target = $region9
    $region8: #{gnn_loss.5} parent=1 // pred_region
      _
    $region9: #{gnn_loss.5} parent=1 // pred_fallthru
      _
    // Predicated region
    $region10: #{gnn_loss.5} parent=1 // pred_check
      _
    $region11: #{gnn_loss.5} parent=1 // pred_check_branch
      %25 = sbr.rel (0) target = $region13
    $region12: #{gnn_loss.5} parent=1 // pred_region
      _
    $region13: #{gnn_loss.5} parent=1 // pred_fallthru
      _
    // Predicated region
    $region14: #{gnn_loss.5} parent=1 // pred_check
      _
    $region15: #{gnn_loss.5} parent=1 // pred_check_branch
      %27 = sbr.rel (0) target = $region17
    $region16: #{gnn_loss.5} parent=1 // pred_region
      _
    $region17: #{gnn_loss.5} parent=1 // pred_fallthru
      _
    // Predicated region
    $region18: #{gnn_loss.5} parent=1 // pred_check
      _
    $region19: #{gnn_loss.5} parent=1 // pred_check_branch
      %29 = sbr.rel (0) target = $region21
    $region20: #{gnn_loss.5} parent=1 // pred_region
      _
    $region21: #{gnn_loss.5} parent=1 // pred_fallthru
      _
    // Predicated region
    $region22: #{gnn_loss.5} parent=1 // pred_check
      _
    $region23: #{gnn_loss.5} parent=1 // pred_check_branch
      %31 = sbr.rel (0) target = $region25
    $region24: #{gnn_loss.5} parent=1 // pred_region
      _
    $region25: #{gnn_loss.5} parent=1 // pred_fallthru
      _
    // Predicated region
    $region26: #{gnn_loss.5} parent=1 // pred_check
      _
    $region27: #{gnn_loss.5} parent=1 // pred_check_branch
      %33 = sbr.rel (0) target = $region29
    $region28: #{gnn_loss.5} parent=1 // pred_region
      _
    $region29: #{gnn_loss.5} parent=1 // pred_fallthru
      _
    // Predicated region
    $region30: #{gnn_loss.5} parent=1 // pred_check
      _
    $region31: #{gnn_loss.5} parent=1 // pred_check_branch
      %35 = sbr.rel (0) target = $region33
    $region32: #{gnn_loss.5} parent=1 // pred_region
      _
    $region33: #{gnn_loss.5} parent=1 // pred_fallthru
      _
    // Predicated region
    $region34: #{gnn_loss.5} parent=1 // pred_check
      _
    $region35: #{gnn_loss.5} parent=1 // pred_check_branch
      %37 = sbr.rel (0) target = $region37
    $region36: #{gnn_loss.5} parent=1 // pred_region
      _
    $region37: #{gnn_loss.5} parent=1 // pred_fallthru
      _
    // Predicated region
    $region38: #{gnn_loss.5} parent=1 // pred_check
      _
    $region39: #{gnn_loss.5} parent=1 // pred_check_branch
      %39 = sbr.rel (0) target = $region41
    $region40: #{gnn_loss.5} parent=1 // pred_region
      _
    $region41: #{gnn_loss.5} parent=1 // pred_fallthru
      _
    // Predicated region
    $region42: #{gnn_loss.5} parent=1 // pred_check
      _
    $region43: #{gnn_loss.5} parent=1 // pred_check_branch
      %41 = sbr.rel (0) target = $region45
    $region44: #{gnn_loss.5} parent=1 // pred_region
      _
    $region45: #{gnn_loss.5} parent=1 // pred_fallthru
      _
    // Predicated region
    $region46: #{gnn_loss.5} parent=1 // pred_check
      _
    $region47: #{gnn_loss.5} parent=1 // pred_check_branch
      %43 = sbr.rel (0) target = $region49
    $region48: #{gnn_loss.5} parent=1 // pred_region
      _
    $region49: #{gnn_loss.5} parent=1 // pred_fallthru
      _
    // Predicated region
    $region50: #{gnn_loss.5} parent=1 // pred_check
      _
    $region51: #{gnn_loss.5} parent=1 // pred_check_branch
      %45 = sbr.rel (0) target = $region53
    $region52: #{gnn_loss.5} parent=1 // pred_region
      _
    $region53: #{gnn_loss.5} parent=1 // pred_fallthru
      _
    // Predicated region
    $region54: #{gnn_loss.5} parent=1 // pred_check
      _
    $region55: #{gnn_loss.5} parent=1 // pred_check_branch
      %47 = sbr.rel (0) target = $region57
    $region56: #{gnn_loss.5} parent=1 // pred_region
      _
    $region57: #{gnn_loss.5} parent=1 // pred_fallthru
      _
    %v48 = vld [vmem:[%s0] sm:$0xff]
    %v49 = vld [vmem:[%s0 + $0x8] sm:$0xff]
    %v50 = vld [vmem:[%s2] sm:$0xff]
    %v51 = vld [vmem:[%s2 + $0x8] sm:$0xff]
    %v52 = vld [vmem:[%s4] sm:$0xff]
    %v53 = vld [vmem:[%s4 + $0x8] sm:$0xff]
    %v54 = vld [vmem:[%s4 + $0x10] sm:$0xff]
    %v55 = vld [vmem:[%s4 + $0x18] sm:$0xff]
    %v56 = vld [vmem:[%s4 + $0x20] sm:$0xff]
    %v57 = vld [vmem:[%s4 + $0x28] sm:$0xff]
    %v58 = vld [vmem:[%s4 + $0x30] sm:$0xff]
    %v59 = vld [vmem:[%s4 + $0x38] sm:$0xff]
    %v60 = vld [vmem:[%s4 + $0x40] sm:$0xff]
    %v61 = vld [vmem:[%s4 + $0x48] sm:$0xff]
    %v62 = vld [vmem:[%s4 + $0x50] sm:$0xff]
    %v63 = vld [vmem:[%s4 + $0x58] sm:$0xff]
    %v64 = vld [vmem:[%s4 + $0x60] sm:$0xff]
    %v65 = vld [vmem:[%s4 + $0x68] sm:$0xff]
    %v66 = vld [vmem:[%s4 + $0x70] sm:$0xff]
    %v67 = vld [vmem:[%s4 + $0x78] sm:$0xff]
    %v68 = vld [vmem:[%s5] sm:$0xff]
    %v69 = vld [vmem:[%s5 + $0x8] sm:$0xff]
    %v70 = vld [vmem:[%s5 + $0x10] sm:$0xff]
    %v71 = vld [vmem:[%s5 + $0x18] sm:$0xff]
    %v72 = vld [vmem:[%s5 + $0x20] sm:$0xff]
    %v73 = vld [vmem:[%s5 + $0x28] sm:$0xff]
    %v74 = vld [vmem:[%s5 + $0x30] sm:$0xff]
    %v75 = vld [vmem:[%s5 + $0x38] sm:$0xff]
    %v76 = vld [vmem:[%s5 + $0x40] sm:$0xff]
    %v77 = vld [vmem:[%s5 + $0x48] sm:$0xff]
    %v78 = vld [vmem:[%s5 + $0x50] sm:$0xff]
    %v79 = vld [vmem:[%s5 + $0x58] sm:$0xff]
    %v80 = vld [vmem:[%s5 + $0x60] sm:$0xff]
    %v81 = vld [vmem:[%s5 + $0x68] sm:$0xff]
    %v82 = vld [vmem:[%s5 + $0x70] sm:$0xff]
    %v83 = vld [vmem:[%s5 + $0x78] sm:$0xff]
    %v84 = vld [vmem:[%s6] sm:$0x1]
    %vm85 = vcmask 130048
    %v87 = vsel %vm85, %v48, 0
    %v90 = vsel %vm85, %v49, 0
    %92 = vmatpush.msra.mxu0 0.0
    %93 = vmatpush.msra.mxu0 0.0
    %94 = vmatpush.msra.mxu0 0.0
    %95 = vmatpush.msra.mxu0 0.0
    %96 = vmatpush.msra.mxu0 0.0
    %97 = vmatpush.msra.mxu0 0.0
    %98 = vmatpush.msra.mxu0 0.0
    %99 = vmatpush.msra.mxu0 0.0
    %100 = vmatpush.msra.mxu0 0.0
    %101 = vmatpush.msra.mxu0 0.0
    %102 = vmatpush.msra.mxu0 0.0
    %103 = vmatpush.msra.mxu0 0.0
    %104 = vmatpush.msra.mxu0 0.0
    %105 = vmatpush.msra.mxu0 0.0
    %106 = vmatpush.msra.mxu0 %v51
    %107 = vmatpush.msra.mxu0 %v50
    %108 = vmatmul.f32.gmra.mxu0 %v87
    %v109 = vpop.f32.mrf.mxu0
    %v110 = vadd.f32 0.0, %v109
    %111 = vmatmul.f32.gmra.mxu0 %v90
    %v112 = vpop.f32.mrf.mxu0
    %v113 = vadd.f32 0.0, %v112
    %114 = vdwg.mxu0
    %115 = vmatpush.msra.mxu0 %v83
    %116 = vmatpush.msra.mxu0 %v82
    %117 = vmatpush.msra.mxu0 %v81
    %118 = vmatpush.msra.mxu0 %v80
    %119 = vmatpush.msra.mxu0 %v79
    %120 = vmatpush.msra.mxu0 %v78
    %121 = vmatpush.msra.mxu0 %v77
    %122 = vmatpush.msra.mxu0 %v76
    %123 = vmatpush.msra.mxu0 %v75
    %124 = vmatpush.msra.mxu0 %v74
    %125 = vmatpush.msra.mxu0 %v73
    %126 = vmatpush.msra.mxu0 %v72
    %127 = vmatpush.msra.mxu0 %v71
    %128 = vmatpush.msra.mxu0 %v70
    %129 = vmatpush.msra.mxu0 %v69
    %130 = vmatpush.msra.mxu0 %v68
    %131 = vmatmul.f32.gmra.mxu0 %v110
    %v132 = vpop.f32.mrf.mxu0
    %v133 = vadd.f32 0.0, %v132
    %134 = vmatmul.f32.gmra.mxu0 %v113
    %v135 = vpop.f32.mrf.mxu0
    %v136 = vadd.f32 0.0, %v135
    %137 = vdwg.mxu0
    %138 = vmatpush.msra.mxu0 %v67
    %139 = vmatpush.msra.mxu0 %v66
    %140 = vmatpush.msra.mxu0 %v65
    %141 = vmatpush.msra.mxu0 %v64
    %142 = vmatpush.msra.mxu0 %v63
    %143 = vmatpush.msra.mxu0 %v62
    %144 = vmatpush.msra.mxu0 %v61
    %145 = vmatpush.msra.mxu0 %v60
    %146 = vmatpush.msra.mxu0 %v59
    %147 = vmatpush.msra.mxu0 %v58
    %148 = vmatpush.msra.mxu0 %v57
    %149 = vmatpush.msra.mxu0 %v56
    %150 = vmatpush.msra.mxu0 %v55
    %151 = vmatpush.msra.mxu0 %v54
    %152 = vmatpush.msra.mxu0 %v53
    %153 = vmatpush.msra.mxu0 %v52
    %154 = vmatmul.f32.gmra.mxu0 %v50
    %v155 = vpop.f32.mrf.mxu0
    %v156 = vadd.f32 %v133, %v155
    %157 = vmatmul.f32.gmra.mxu0 %v51
    %v158 = vpop.f32.mrf.mxu0
    %v159 = vadd.f32 %v136, %v158
    %160 = vdwg.mxu0
    %v162 = vperm.slane %v84, 0
    %v164 = vadd.f32 %v156, %v162
    %v165 = vadd.f32 %v159, %v162
    %v166 = vmul.f32 %v164, %v164
    %v167 = vmul.f32 %v165, %v165
    %168 = vadd.xlane.f32.xlu0 %v166
    %v169 = vpop.xlane.xlu0 %168
    %170 = vadd.xlane.f32.xlu0 %v167
    %v171 = vpop.xlane.xlu0 %170
    %v172 = vmax.f32 %v169, 1e-12
    %v173 = vmax.f32 %v171, 1e-12
    %v174 = vrsqrt.pop %v172
    %v175 = vmul.f32 %v174, %v172
    %v176 = vmul.f32 %v175, %v174
    %v177 = vmul.f32 0.5, %v176
    %v178 = vsub.f32 1.5, %v177
    %v179 = vmul.f32 %v174, %v178
    %vm180 = vweird.f32 %v172
    %vm181 = vweird.f32 %v174
    %vm182 = vmor %vm180, %vm181
    %v183 = vsel %vm182, %v174, %v179
    %v184 = vrsqrt.pop %v173
    %v185 = vmul.f32 %v184, %v173
    %v186 = vmul.f32 %v185, %v184
    %v187 = vmul.f32 0.5, %v186
    %v188 = vsub.f32 1.5, %v187
    %v189 = vmul.f32 %v184, %v188
    %vm190 = vweird.f32 %v173
    %vm191 = vweird.f32 %v184
    %vm192 = vmor %vm190, %vm191
    %v193 = vsel %vm192, %v184, %v189
    %v194 = vmul.f32 %v164, %v183
    %v195 = vmul.f32 %v165, %v193
    %v196 = vld [vmem:[%s1] sm:$0xff]
    %v197 = vld [vmem:[%s1 + $0x8] sm:$0xff]
    %v198 = vld [vmem:[%s3] sm:$0xff]
    %v199 = vld [vmem:[%s3 + $0x8] sm:$0xff]
    %v200 = vld [vmem:[%s7] sm:$0xff]
    %v201 = vld [vmem:[%s7 + $0x8] sm:$0xff]
    %v202 = vld [vmem:[%s7 + $0x10] sm:$0xff]
    %v203 = vld [vmem:[%s7 + $0x18] sm:$0xff]
    %v204 = vld [vmem:[%s7 + $0x20] sm:$0xff]
    %v205 = vld [vmem:[%s7 + $0x28] sm:$0xff]
    %v206 = vld [vmem:[%s7 + $0x30] sm:$0xff]
    %v207 = vld [vmem:[%s7 + $0x38] sm:$0xff]
    %v208 = vld [vmem:[%s7 + $0x40] sm:$0xff]
    %v209 = vld [vmem:[%s7 + $0x48] sm:$0xff]
    %v210 = vld [vmem:[%s7 + $0x50] sm:$0xff]
    %v211 = vld [vmem:[%s7 + $0x58] sm:$0xff]
    %v212 = vld [vmem:[%s7 + $0x60] sm:$0xff]
    %v213 = vld [vmem:[%s7 + $0x68] sm:$0xff]
    %v214 = vld [vmem:[%s7 + $0x70] sm:$0xff]
    %v215 = vld [vmem:[%s7 + $0x78] sm:$0xff]
    %v216 = vld [vmem:[%s8] sm:$0xff]
    %v217 = vld [vmem:[%s8 + $0x8] sm:$0xff]
    %v218 = vld [vmem:[%s8 + $0x10] sm:$0xff]
    %v219 = vld [vmem:[%s8 + $0x18] sm:$0xff]
    %v220 = vld [vmem:[%s8 + $0x20] sm:$0xff]
    %v221 = vld [vmem:[%s8 + $0x28] sm:$0xff]
    %v222 = vld [vmem:[%s8 + $0x30] sm:$0xff]
    %v223 = vld [vmem:[%s8 + $0x38] sm:$0xff]
    %v224 = vld [vmem:[%s8 + $0x40] sm:$0xff]
    %v225 = vld [vmem:[%s8 + $0x48] sm:$0xff]
    %v226 = vld [vmem:[%s8 + $0x50] sm:$0xff]
    %v227 = vld [vmem:[%s8 + $0x58] sm:$0xff]
    %v228 = vld [vmem:[%s8 + $0x60] sm:$0xff]
    %v229 = vld [vmem:[%s8 + $0x68] sm:$0xff]
    %v230 = vld [vmem:[%s8 + $0x70] sm:$0xff]
    %v231 = vld [vmem:[%s8 + $0x78] sm:$0xff]
    %v232 = vld [vmem:[%s9] sm:$0x1]
    %v234 = vsel %vm85, %v196, 0
    %v237 = vsel %vm85, %v197, 0
    %239 = vmatpush.msra.mxu0 0.0
    %240 = vmatpush.msra.mxu0 0.0
    %241 = vmatpush.msra.mxu0 0.0
    %242 = vmatpush.msra.mxu0 0.0
    %243 = vmatpush.msra.mxu0 0.0
    %244 = vmatpush.msra.mxu0 0.0
    %245 = vmatpush.msra.mxu0 0.0
    %246 = vmatpush.msra.mxu0 0.0
    %247 = vmatpush.msra.mxu0 0.0
    %248 = vmatpush.msra.mxu0 0.0
    %249 = vmatpush.msra.mxu0 0.0
    %250 = vmatpush.msra.mxu0 0.0
    %251 = vmatpush.msra.mxu0 0.0
    %252 = vmatpush.msra.mxu0 0.0
    %253 = vmatpush.msra.mxu0 %v199
    %254 = vmatpush.msra.mxu0 %v198
    %255 = vmatmul.f32.gmra.mxu0 %v234
    %v256 = vpop.f32.mrf.mxu0
    %v257 = vadd.f32 0.0, %v256
    %258 = vmatmul.f32.gmra.mxu0 %v237
    %v259 = vpop.f32.mrf.mxu0
    %v260 = vadd.f32 0.0, %v259
    %261 = vdwg.mxu0
    %262 = vmatpush.msra.mxu0 %v231
    %263 = vmatpush.msra.mxu0 %v230
    %264 = vmatpush.msra.mxu0 %v229
    %265 = vmatpush.msra.mxu0 %v228
    %266 = vmatpush.msra.mxu0 %v227
    %267 = vmatpush.msra.mxu0 %v226
    %268 = vmatpush.msra.mxu0 %v225
    %269 = vmatpush.msra.mxu0 %v224
    %270 = vmatpush.msra.mxu0 %v223
    %271 = vmatpush.msra.mxu0 %v222
    %272 = vmatpush.msra.mxu0 %v221
    %273 = vmatpush.msra.mxu0 %v220
    %274 = vmatpush.msra.mxu0 %v219
    %275 = vmatpush.msra.mxu0 %v218
    %276 = vmatpush.msra.mxu0 %v217
    %277 = vmatpush.msra.mxu0 %v216
    %278 = vmatmul.f32.gmra.mxu0 %v257
    %v279 = vpop.f32.mrf.mxu0
    %v280 = vadd.f32 0.0, %v279
    %281 = vmatmul.f32.gmra.mxu0 %v260
    %v282 = vpop.f32.mrf.mxu0
    %v283 = vadd.f32 0.0, %v282
    %284 = vdwg.mxu0
    %285 = vmatpush.msra.mxu0 %v215
    %286 = vmatpush.msra.mxu0 %v214
    %287 = vmatpush.msra.mxu0 %v213
    %288 = vmatpush.msra.mxu0 %v212
    %289 = vmatpush.msra.mxu0 %v211
    %290 = vmatpush.msra.mxu0 %v210
    %291 = vmatpush.msra.mxu0 %v209
    %292 = vmatpush.msra.mxu0 %v208
    %293 = vmatpush.msra.mxu0 %v207
    %294 = vmatpush.msra.mxu0 %v206
    %295 = vmatpush.msra.mxu0 %v205
    %296 = vmatpush.msra.mxu0 %v204
    %297 = vmatpush.msra.mxu0 %v203
    %298 = vmatpush.msra.mxu0 %v202
    %299 = vmatpush.msra.mxu0 %v201
    %300 = vmatpush.msra.mxu0 %v200
    %301 = vmatmul.f32.gmra.mxu0 %v198
    %v302 = vpop.f32.mrf.mxu0
    %v303 = vadd.f32 %v280, %v302
    %304 = vmatmul.f32.gmra.mxu0 %v199
    %v305 = vpop.f32.mrf.mxu0
    %v306 = vadd.f32 %v283, %v305
    %307 = vdwg.mxu0
    %v309 = vperm.slane %v232, 0
    %v311 = vadd.f32 %v303, %v309
    %v312 = vadd.f32 %v306, %v309
    %v313 = vmul.f32 %v311, %v311
    %v314 = vmul.f32 %v312, %v312
    %315 = vadd.xlane.f32.xlu0 %v313
    %v316 = vpop.xlane.xlu0 %315
    %317 = vadd.xlane.f32.xlu0 %v314
    %v318 = vpop.xlane.xlu0 %317
    %v319 = vmax.f32 %v316, 1e-12
    %v320 = vmax.f32 %v318, 1e-12
    %v321 = vrsqrt.pop %v319
    %v322 = vmul.f32 %v321, %v319
    %v323 = vmul.f32 %v322, %v321
    %v324 = vmul.f32 0.5, %v323
    %v325 = vsub.f32 1.5, %v324
    %v326 = vmul.f32 %v321, %v325
    %vm327 = vweird.f32 %v319
    %vm328 = vweird.f32 %v321
    %vm329 = vmor %vm327, %vm328
    %v330 = vsel %vm329, %v321, %v326
    %v331 = vrsqrt.pop %v320
    %v332 = vmul.f32 %v331, %v320
    %v333 = vmul.f32 %v332, %v331
    %v334 = vmul.f32 0.5, %v333
    %v335 = vsub.f32 1.5, %v334
    %v336 = vmul.f32 %v331, %v335
    %vm337 = vweird.f32 %v320
    %vm338 = vweird.f32 %v331
    %vm339 = vmor %vm337, %vm338
    %v340 = vsel %vm339, %v331, %v336
    %v341 = vmul.f32 %v311, %v330
    %v342 = vmul.f32 %v312, %v340
    %v343 = vld [vmem:[%s10] sm:$0xff]
    %v344 = vld [vmem:[%s10 + $0x8] sm:$0xff]
    %v345 = vmul.f32 %v343, 0.75
    %v346 = vmul.f32 %v344, 0.75
    %v347 = vmul.f32 %v194, 0.25
    %v348 = vmul.f32 %v195, 0.25
    %v349 = vadd.f32 %v345, %v347
    %v350 = vadd.f32 %v346, %v348
    %v351 = vmul.f32 %v349, %v349
    %v352 = vmul.f32 %v350, %v350
    %353 = vadd.xlane.f32.xlu0 %v351
    %v354 = vpop.xlane.xlu0 %353
    %355 = vadd.xlane.f32.xlu0 %v352
    %v356 = vpop.xlane.xlu0 %355
    %v357 = vmax.f32 %v354, 1e-12
    %v358 = vmax.f32 %v356, 1e-12
    %v359 = vrsqrt.pop %v357
    %v360 = vmul.f32 %v359, %v357
    %v361 = vmul.f32 %v360, %v359
    %v362 = vmul.f32 0.5, %v361
    %v363 = vsub.f32 1.5, %v362
    %v364 = vmul.f32 %v359, %v363
    %vm365 = vweird.f32 %v357
    %vm366 = vweird.f32 %v359
    %vm367 = vmor %vm365, %vm366
    %v368 = vsel %vm367, %v359, %v364
    %v369 = vrsqrt.pop %v358
    %v370 = vmul.f32 %v369, %v358
    %v371 = vmul.f32 %v370, %v369
    %v372 = vmul.f32 0.5, %v371
    %v373 = vsub.f32 1.5, %v372
    %v374 = vmul.f32 %v369, %v373
    %vm375 = vweird.f32 %v358
    %vm376 = vweird.f32 %v369
    %vm377 = vmor %vm375, %vm376
    %v378 = vsel %vm377, %v369, %v374
    %v379 = vmul.f32 %v349, %v368
    %v380 = vmul.f32 %v350, %v378
    %v381 = vld [vmem:[%s11] sm:$0xff]
    %v382 = vld [vmem:[%s11 + $0x8] sm:$0xff]
    %v383 = vmul.f32 %v381, 0.75
    %v384 = vmul.f32 %v382, 0.75
    %v385 = vmul.f32 %v341, 0.25
    %v386 = vmul.f32 %v342, 0.25
    %v387 = vadd.f32 %v383, %v385
    %v388 = vadd.f32 %v384, %v386
    %v389 = vmul.f32 %v387, %v387
    %v390 = vmul.f32 %v388, %v388
    %391 = vadd.xlane.f32.xlu0 %v389
    %v392 = vpop.xlane.xlu0 %391
    %393 = vadd.xlane.f32.xlu0 %v390
    %v394 = vpop.xlane.xlu0 %393
    %v395 = vmax.f32 %v392, 1e-12
    %v396 = vmax.f32 %v394, 1e-12
    %v397 = vrsqrt.pop %v395
    %v398 = vmul.f32 %v397, %v395
    %v399 = vmul.f32 %v398, %v397
    %v400 = vmul.f32 0.5, %v399
    %v401 = vsub.f32 1.5, %v400
    %v402 = vmul.f32 %v397, %v401
    %vm403 = vweird.f32 %v395
    %vm404 = vweird.f32 %v397
    %vm405 = vmor %vm403, %vm404
    %v406 = vsel %vm405, %v397, %v402
    %v407 = vrsqrt.pop %v396
    %v408 = vmul.f32 %v407, %v396
    %v409 = vmul.f32 %v408, %v407
    %v410 = vmul.f32 0.5, %v409
    %v411 = vsub.f32 1.5, %v410
    %v412 = vmul.f32 %v407, %v411
    %vm413 = vweird.f32 %v396
    %vm414 = vweird.f32 %v407
    %vm415 = vmor %vm413, %vm414
    %v416 = vsel %vm415, %v407, %v412
    %v417 = vmul.f32 %v387, %v406
    %v418 = vmul.f32 %v388, %v416
    %v419 = vld [vmem:[%s12] sm:$0xff]
    %v420 = vld [vmem:[%s12 + $0x8] sm:$0xff]
    %v421 = vld [vmem:[%s12 + $0x10] sm:$0xff]
    %v422 = vld [vmem:[%s12 + $0x18] sm:$0xff]
    %v423 = vld [vmem:[%s12 + $0x20] sm:$0xff]
    %v424 = vld [vmem:[%s12 + $0x28] sm:$0xff]
    %v425 = vld [vmem:[%s12 + $0x30] sm:$0xff]
    %v426 = vld [vmem:[%s12 + $0x38] sm:$0xff]
    %v427 = vmul.f32 %v417, %v194
    %v428 = vmul.f32 %v418, %v195
    %429 = vadd.xlane.f32.xlu0 %v427
    %v430 = vpop.xlane.xlu0 %429
    %431 = vadd.xlane.f32.xlu0 %v428
    %v432 = vpop.xlane.xlu0 %431
    %v433 = vmul.f32 %v430, 14.285714
    %v434 = vmul.f32 %v432, 14.285714
    %435 = vmatpush.xpose.msra.mxu0 0.0
    %436 = vmatpush.xpose.msra.mxu0 0.0
    %437 = vmatpush.xpose.msra.mxu0 0.0
    %438 = vmatpush.xpose.msra.mxu0 0.0
    %439 = vmatpush.xpose.msra.mxu0 0.0
    %440 = vmatpush.xpose.msra.mxu0 0.0
    %441 = vmatpush.xpose.msra.mxu0 0.0
    %442 = vmatpush.xpose.msra.mxu0 0.0
    %443 = vmatpush.xpose.msra.mxu0 %v426
    %444 = vmatpush.xpose.msra.mxu0 %v425
    %445 = vmatpush.xpose.msra.mxu0 %v424
    %446 = vmatpush.xpose.msra.mxu0 %v423
    %447 = vmatpush.xpose.msra.mxu0 %v422
    %448 = vmatpush.xpose.msra.mxu0 %v421
    %449 = vmatpush.xpose.msra.mxu0 %v420
    %450 = vmatpush.xpose.msra.mxu0 %v419
    %451 = vmatmul.f32.gmra.mxu0 %v194
    %v452 = vpop.f32.mrf.mxu0
    %v453 = vadd.f32 0.0, %v452
    %454 = vmatmul.f32.gmra.mxu0 %v195
    %v455 = vpop.f32.mrf.mxu0
    %v456 = vadd.f32 0.0, %v455
    %457 = vdwg.mxu0
    %v458 = vmul.f32 %v453, 14.285714
    %v459 = vmul.f32 %v456, 14.285714
    %v460 = vlaneseq
    %v461 = vshrl.u32 %v460, 7
    %v462 = vadd.s32 %v461, 8
    %v463 = vlaneseq
    %v464 = vand.u32 %v463, 127
    %v465 = vmul.u32 %v461, 4
    %v466 = vmul.u32 %v462, 4
    %vm467 = vcmp.ge.s32.totalorder %v464, %v465
    %vm468 = vcmp.ge.s32.totalorder %v464, %v466
    %v469 = vadd.s32 %v465, 4
    %v470 = vadd.s32 %v466, 4
    %vm471 = vcmp.lt.s32.totalorder %v464, %v469
    %vm472 = vcmp.lt.s32.totalorder %v464, %v470
    %vm473 = vmand %vm467, %vm471
    %vm474 = vmand %vm468, %vm472
    %v475 = vsel %vm473, %v458, -inf
    %v476 = vsel %vm474, %v459, -inf
    %vm477 = vcmask 523264
    %v478 = vsel %vm477, %v475, -inf
    %479 = vmax.xlane.f32.xlu0 %v478
    %v480 = vpop.xlane.xlu0 %479
    %v481 = vsel %vm477, %v476, -inf
    %482 = vmax.xlane.f32.xlu0 %v481
    %v483 = vpop.xlane.xlu0 %482
    %v484 = vmax.f32 %v480, %v433
    %v485 = vmax.f32 %v483, %v434
    %v486 = vsub.f32 %v433, %v484
    %v487 = vsub.f32 %v434, %v485
    %v488 = vmul.f32 %v486, 1.442695
    %v489 = vpow.pop %v488
    %v490 = vmul.f32 %v487, 1.442695
    %v491 = vpow.pop %v490
    %v492 = vsub.f32 %v475, %v484
    %v493 = vsub.f32 %v476, %v485
    %v494 = vmul.f32 %v492, 1.442695
    %v495 = vpow.pop %v494
    %v496 = vmul.f32 %v493, 1.442695
    %v497 = vpow.pop %v496
    %v498 = vsel %vm477, %v495, 0.0
    %499 = vadd.xlane.f32.xlu0 %v498
    %v500 = vpop.xlane.xlu0 %499
    %v501 = vsel %vm477, %v497, 0.0
    %502 = vadd.xlane.f32.xlu0 %v501
    %v503 = vpop.xlane.xlu0 %502
    %v504 = vadd.f32 %v489, %v500
    %v505 = vadd.f32 %v491, %v503
    %v506 = vlog2.pop %v504
    %v507 = vmul.f32 %v506, 0.6931472
    %v508 = vlog2.pop %v505
    %v509 = vmul.f32 %v508, 0.6931472
    %v510 = vadd.f32 %v507, %v484
    %v511 = vadd.f32 %v509, %v485
    %v512 = vsub.f32 %v510, %v433
    %v513 = vsub.f32 %v511, %v434
    %vm514 = vcmask 7168
    %v515 = vsel %vm514, %v512, 0.0
    %v516 = vsel %vm514, %v513, 0.0
    %v517 = vadd.f32 %v515, %v516
    %518 = vadd.xlane.f32.xlu0 %v517
    %v519 = vpop.xlane.xlu0 %518
    %v520 = vrot.slane %v519, 4
    %v521 = vadd.f32 %v519, %v520
    %v522 = vrot.slane %v521, 2
    %v523 = vadd.f32 %v521, %v522
    %v524 = vrot.slane %v523, 1
    %v525 = vadd.f32 %v523, %v524
    %s526 = vtos %v525
    %s527 = smul.f32 %s526, 0.0625
    %v528 = vld [vmem:[%s13] sm:$0xff]
    %v529 = vld [vmem:[%s13 + $0x8] sm:$0xff]
    %v530 = vld [vmem:[%s13 + $0x10] sm:$0xff]
    %v531 = vld [vmem:[%s13 + $0x18] sm:$0xff]
    %v532 = vld [vmem:[%s13 + $0x20] sm:$0xff]
    %v533 = vld [vmem:[%s13 + $0x28] sm:$0xff]
    %v534 = vld [vmem:[%s13 + $0x30] sm:$0xff]
    %v535 = vld [vmem:[%s13 + $0x38] sm:$0xff]
    %v536 = vmul.f32 %v379, %v341
    %v537 = vmul.f32 %v380, %v342
    %538 = vadd.xlane.f32.xlu0 %v536
    %v539 = vpop.xlane.xlu0 %538
    %540 = vadd.xlane.f32.xlu0 %v537
    %v541 = vpop.xlane.xlu0 %540
    %v542 = vmul.f32 %v539, 14.285714
    %v543 = vmul.f32 %v541, 14.285714
    %544 = vmatpush.xpose.msra.mxu0 0.0
    %545 = vmatpush.xpose.msra.mxu0 0.0
    %546 = vmatpush.xpose.msra.mxu0 0.0
    %547 = vmatpush.xpose.msra.mxu0 0.0
    %548 = vmatpush.xpose.msra.mxu0 0.0
    %549 = vmatpush.xpose.msra.mxu0 0.0
    %550 = vmatpush.xpose.msra.mxu0 0.0
    %551 = vmatpush.xpose.msra.mxu0 0.0
    %552 = vmatpush.xpose.msra.mxu0 %v535
    %553 = vmatpush.xpose.msra.mxu0 %v534
    %554 = vmatpush.xpose.msra.mxu0 %v533
    %555 = vmatpush.xpose.msra.mxu0 %v532
    %556 = vmatpush.xpose.msra.mxu0 %v531
    %557 = vmatpush.xpose.msra.mxu0 %v530
    %558 = vmatpush.xpose.msra.mxu0 %v529
    %559 = vmatpush.xpose.msra.mxu0 %v528
    %560 = vmatmul.f32.gmra.mxu0 %v341
    %v561 = vpop.f32.mrf.mxu0
    %v562 = vadd.f32 0.0, %v561
    %563 = vmatmul.f32.gmra.mxu0 %v342
    %v564 = vpop.f32.mrf.mxu0
    %v565 = vadd.f32 0.0, %v564
    %566 = vdwg.mxu0
    %v567 = vmul.f32 %v562, 14.285714
    %v568 = vmul.f32 %v565, 14.285714
    %v569 = vsel %vm473, %v567, -inf
    %v570 = vsel %vm474, %v568, -inf
    %v571 = vsel %vm477, %v569, -inf
    %572 = vmax.xlane.f32.xlu0 %v571
    %v573 = vpop.xlane.xlu0 %572
    %v574 = vsel %vm477, %v570, -inf
    %575 = vmax.xlane.f32.xlu0 %v574
    %v576 = vpop.xlane.xlu0 %575
    %v577 = vmax.f32 %v573, %v542
    %v578 = vmax.f32 %v576, %v543
    %v579 = vsub.f32 %v542, %v577
    %v580 = vsub.f32 %v543, %v578
    %v581 = vmul.f32 %v579, 1.442695
    %v582 = vpow.pop %v581
    %v583 = vmul.f32 %v580, 1.442695
    %v584 = vpow.pop %v583
    %v585 = vsub.f32 %v569, %v577
    %v586 = vsub.f32 %v570, %v578
    %v587 = vmul.f32 %v585, 1.442695
    %v588 = vpow.pop %v587
    %v589 = vmul.f32 %v586, 1.442695
    %v590 = vpow.pop %v589
    %v591 = vsel %vm477, %v588, 0.0
    %592 = vadd.xlane.f32.xlu0 %v591
    %v593 = vpop.xlane.xlu0 %592
    %v594 = vsel %vm477, %v590, 0.0
    %595 = vadd.xlane.f32.xlu0 %v594
    %v596 = vpop.xlane.xlu0 %595
    %v597 = vadd.f32 %v582, %v593
    %v598 = vadd.f32 %v584, %v596
    %v599 = vlog2.pop %v597
    %v600 = vmul.f32 %v599, 0.6931472
    %v601 = vlog2.pop %v598
    %v602 = vmul.f32 %v601, 0.6931472
    %v603 = vadd.f32 %v600, %v577
    %v604 = vadd.f32 %v602, %v578
    %v605 = vsub.f32 %v603, %v542
    %v606 = vsub.f32 %v604, %v543
    %v607 = vsel %vm514, %v605, 0.0
    %v608 = vsel %vm514, %v606, 0.0
    %v609 = vadd.f32 %v607, %v608
    %610 = vadd.xlane.f32.xlu0 %v609
    %v611 = vpop.xlane.xlu0 %610
    %v612 = vrot.slane %v611, 4
    %v613 = vadd.f32 %v611, %v612
    %v614 = vrot.slane %v613, 2
    %v615 = vadd.f32 %v613, %v614
    %v616 = vrot.slane %v615, 1
    %v617 = vadd.f32 %v615, %v616
    %s618 = vtos %v617
    %s619 = smul.f32 %s618, 0.0625
    %s620 = sadd.f32 %s527, %s619
    %v621 = vstv %s620
    %vm622 = vcmask 0
    %623 = vst.msk [vmem:[#allocation2] sm:$0x1] %vm622, %v621
    // Predicated region
    $region58: #{gnn_loss.5} parent=1 // pred_check
      _
    $region59: #{gnn_loss.5} parent=1 // pred_check_branch
      %625 = sbr.rel (0) target = $region61
    $region60: #{gnn_loss.5} parent=1 // pred_region
      %627 = vsyncadd [#allocation3], 0
      %s629 = sshll.u32 [#allocation2], 4
      %s630 = int_to_ptr.vmem [resolvable:$true] %s629
      %s631 = sshll.u32 %s14, 4
      %s632 = int_to_ptr.hbm [resolvable:$true] %s631
      %634 = dma.vmem_to_hbm [thread:$0]  %s630, 16, %s632, [#allocation3]
    $region61: #{gnn_loss.5} parent=1 // pred_fallthru
      _
    // Predicated region
    $region62: #{gnn_loss.5} parent=1 // pred_check
      _
    $region63: #{gnn_loss.5} parent=1 // pred_check_branch
      %636 = sbr.rel (0) target = $region65
    $region64: #{gnn_loss.5} parent=1 // pred_region
      %638 = dma.done [#allocation3], 16
    $region65: #{gnn_loss.5} parent=1 // pred_fallthru
      _
    %639 = vsyncpa [#allocation3], 1

</llo_original>
